<compile_context>
chip_gen: v7x
topology: tpu7x:2x2x1
jax: 0.10.0
libtpu: 0.0.40
codegen_flags: <defaults>
</compile_context>

<pallas_src>
import functools

import jax
import jax.numpy as jnp
from jax.experimental import pallas as pl
from jax.experimental.pallas import tpu as pltpu


def _round_up(x: int, m: int) -> int:
    return ((x + m - 1) // m) * m


# ----------------------------------------------------------------------------
# Generic tiled GCN layer:  out = [ReLU]( (Â @ X) @ W + b )
#   Â : (N, N)  bf16      X : (N, C_in)     bf16
#   W : (C_in, C_out) bf16   b : (1, C_out) f32
# grid = (N // tile_m, N // tile_k); axis 1 is the Â reduction.
# ----------------------------------------------------------------------------
def gcn_layer_kernel(a_ref, x_ref, w_ref, b_ref, o_ref, acc_ref, *, apply_relu):
    k = pl.program_id(1)

    @pl.when(k == 0)
    def _init():
        acc_ref[...] = jnp.zeros_like(acc_ref)

    # Hot loop: pure MXU, bf16 operands, f32 accumulation.
    acc_ref[...] += jnp.dot(a_ref[...], x_ref[...],
                            preferred_element_type=jnp.float32)

    @pl.when(k == pl.num_programs(1) - 1)
    def _finalize():
        out = jnp.dot(acc_ref[...].astype(jnp.bfloat16), w_ref[...],
                      preferred_element_type=jnp.float32) + b_ref[...]
        if apply_relu:
            out = jnp.maximum(out, 0.0)
        o_ref[...] = out.astype(o_ref.dtype)


def gcn_layer(a, x, w, b, *, apply_relu, out_dtype, tile_m=256, tile_k=256):
    n = a.shape[0]
    c_in = x.shape[1]
    c_out = w.shape[1]
    grid = (n // tile_m, n // tile_k)
    kernel = functools.partial(gcn_layer_kernel, apply_relu=apply_relu)
    return pl.pallas_call(
        kernel,
        out_shape=jax.ShapeDtypeStruct((n, c_out), out_dtype),
        grid_spec=pltpu.PrefetchScalarGridSpec(
            num_scalar_prefetch=0,
            grid=grid,
            in_specs=[
                pl.BlockSpec((tile_m, tile_k), lambda i, k: (i, k)),  # Â tile
                pl.BlockSpec((tile_k, c_in),   lambda i, k: (k, 0)),  # X panel
                pl.BlockSpec((c_in, c_out),    lambda i, k: (0, 0)),  # W (resident)
                pl.BlockSpec((1, c_out),       lambda i, k: (0, 0)),  # b (resident)
            ],
            out_specs=pl.BlockSpec((tile_m, c_out), lambda i, k: (i, 0)),
            scratch_shapes=[pltpu.VMEM((tile_m, c_in), jnp.float32)],
        ),
        compiler_params=pltpu.CompilerParams(
            dimension_semantics=("parallel", "arbitrary"),
        ),
    )(a, x, w, b)


# ----------------------------------------------------------------------------
# Full forward pass: pad to tile/lane-friendly shapes, run two tiled layers.
# ----------------------------------------------------------------------------
@functools.partial(jax.jit, static_argnames=("tile",))
def gnn_forward(a_hat, x, w1, b1, w2, b2, *, tile=256):
    n, c_in = x.shape
    c_hid = w1.shape[1]
    c_out = w2.shape[1]

    n_pad = _round_up(n, tile)
    c_in_pad = _round_up(c_in, 128)
    c_hid_pad = _round_up(c_hid, 128)
    c_out_pad = _round_up(c_out, 128)

    # zero-pad (padded rows/cols contribute nothing; sliced off at the end)
    a_p = jnp.zeros((n_pad, n_pad), jnp.bfloat16).at[:n, :n].set(
        a_hat.astype(jnp.bfloat16))
    x_p = jnp.zeros((n_pad, c_in_pad), jnp.bfloat16).at[:n, :c_in].set(
        x.astype(jnp.bfloat16))
    w1_p = jnp.zeros((c_in_pad, c_hid_pad), jnp.bfloat16).at[:c_in, :c_hid].set(
        w1.astype(jnp.bfloat16))
    b1_p = jnp.zeros((1, c_hid_pad), jnp.float32).at[:, :c_hid].set(b1)
    w2_p = jnp.zeros((c_hid_pad, c_out_pad), jnp.bfloat16).at[:c_hid, :c_out].set(
        w2.astype(jnp.bfloat16))
    b2_p = jnp.zeros((1, c_out_pad), jnp.float32).at[:, :c_out].set(b2)

    # layer 1: h = ReLU(Â X W1 + b1); bf16 output feeds layer 2's matmuls
    h = gcn_layer(a_p, x_p, w1_p, b1_p, apply_relu=True,
                  out_dtype=jnp.bfloat16, tile_m=tile, tile_k=tile)
    # Dropout(0.1): identity in eval mode
    # layer 2: out = Â h W2 + b2
    out = gcn_layer(a_p, h, w2_p, b2_p, apply_relu=False,
                    out_dtype=jnp.float32, tile_m=tile, tile_k=tile)
    return out[:n, :c_out]


# ----------------------------------------------------------------------------
# Plain-JAX glue + reference
# ----------------------------------------------------------------------------
def normalized_adjacency(edge_index, num_nodes):
    """Dense Â = D^{-1/2}(A + I)D^{-1/2}; A[i, j] = 1 for each edge j -> i."""
    src, dst = edge_index[0], edge_index[1]
    a = jnp.zeros((num_nodes, num_nodes), jnp.float32)
    a = a.at[dst, src].add(1.0)
    a = a + jnp.eye(num_nodes, dtype=jnp.float32)   # add self-loops
    deg = a.sum(axis=1)
    dinv = jnp.where(deg > 0.0, jax.lax.rsqrt(deg), 0.0)
    return a * dinv[:, None] * dinv[None, :]


def gnn_reference(a_hat, x, w1, b1, w2, b2):
    h = jnp.maximum(a_hat @ (x @ w1) + b1, 0.0)
    return a_hat @ (h @ w2) + b2


def glorot(key, fan_in, fan_out):
    limit = jnp.sqrt(6.0 / (fan_in + fan_out))
    return jax.random.uniform(key, (fan_in, fan_out), jnp.float32, -limit, limit)


if __name__ == "__main__":
    N, E = 512, 2048
    in_channels, hidden_channels, out_channels = 16, 128, 64

    key = jax.random.PRNGKey(0)
    k_x, k_src, k_dst, k_w1, k_w2 = jax.random.split(key, 5)

    # deterministic inputs
    x = jax.random.normal(k_x, (N, in_channels), jnp.float32)
    src = jax.random.randint(k_src, (E,), 0, N, jnp.int32)
    dst = jax.random.randint(k_dst, (E,), 0, N, jnp.int32)
    edge_index = jnp.stack([src, dst], axis=0)          # (2, E)

    # deterministic parameters (GCNConv: glorot weight, zero bias)
    w1 = glorot(k_w1, in_channels, hidden_channels)     # stored as (in, out) = W1ᵀ
    b1 = jnp.zeros((1, hidden_channels), jnp.float32)
    w2 = glorot(k_w2, hidden_channels, out_channels)    # stored as (hidden, out) = W2ᵀ
    b2 = jnp.zeros((1, out_channels), jnp.float32)

    a_hat = normalized_adjacency(edge_index, N)

    out = gnn_forward(a_hat, x, w1, b1, w2, b2)
    jax.block_until_ready(out)
    assert out.shape == (N, out_channels) and out.dtype == jnp.float32

    ref = gnn_reference(a_hat, x, w1, b1, w2, b2)
    err = float(jnp.max(jnp.abs(out - ref)))
    assert err < 1e-1, f"max abs err {err}"
    print("KERNEL_OK")
</pallas_src>

<mosaic_0001>
module attributes {stable_mosaic.version = 11 : i64} {
  func.func @gcn_layer_kernel(%arg0: i32, %arg1: i32, %arg2: memref<256x256xbf16, #tpu.memory_space<vmem>>, %arg3: memref<256x128xbf16, #tpu.memory_space<vmem>>, %arg4: memref<128x128xbf16, #tpu.memory_space<vmem>>, %arg5: memref<1x128xf32, #tpu.memory_space<vmem>>, %arg6: memref<256x128xf32, #tpu.memory_space<vmem>>, %arg7: memref<256x128xf32, #tpu.memory_space<vmem>>) attributes {dimension_semantics = [#tpu.dimension_semantics<parallel>, #tpu.dimension_semantics<arbitrary>], iteration_bounds = array<i64: 2, 2>, scalar_prefetch = 0 : i64, scratch_operands = 1 : i64, tpu.core_type = #tpu.core_type<tc>, window_params = [{transform_indices = @transform_0, window_bounds = array<i64: 256, 256>}, {transform_indices = @transform_1, window_bounds = array<i64: 256, 128>}, {pipeline_mode = #tpu.pipeline_mode<synchronous>, transform_indices = @transform_2, window_bounds = array<i64: 128, 128>}, {pipeline_mode = #tpu.pipeline_mode<synchronous>, transform_indices = @transform_3, window_bounds = array<i64: 1, 128>}, {transform_indices = @transform_4, window_bounds = array<i64: 256, 128>}]} {
    %c0_i32 = arith.constant 0 : i32
    %0 = arith.cmpi eq, %arg1, %c0_i32 : i32
    %1 = arith.extui %0 : i1 to i32
    %c0_i32_0 = arith.constant 0 : i32
    %2 = arith.cmpi ne, %1, %c0_i32_0 : i32
    scf.if %2 {
      %cst_9 = arith.constant 0.000000e+00 : f32
      %12 = vector.broadcast %cst_9 : f32 to vector<256x128xf32>
      %c0_10 = arith.constant 0 : index
      %c0_11 = arith.constant 0 : index
      %13 = vector.load %arg7[%c0_10, %c0_11] : memref<256x128xf32, #tpu.memory_space<vmem>>, vector<256x128xf32>
      tpu.vector_store %arg7[%c0_10, %c0_11], %12 {strides = array<i32>} : memref<256x128xf32, #tpu.memory_space<vmem>>, vector<256x128xf32>,
    } else {
    }
    %c0 = arith.constant 0 : index
    %c0_1 = arith.constant 0 : index
    %3 = vector.load %arg7[%c0, %c0_1] : memref<256x128xf32, #tpu.memory_space<vmem>>, vector<256x128xf32>
    %c0_2 = arith.constant 0 : index
    %c0_3 = arith.constant 0 : index
    %4 = vector.load %arg2[%c0_2, %c0_3] : memref<256x256xbf16, #tpu.memory_space<vmem>>, vector<256x256xbf16>
    %c0_4 = arith.constant 0 : index
    %c0_5 = arith.constant 0 : index
    %5 = vector.load %arg3[%c0_4, %c0_5] : memref<256x128xbf16, #tpu.memory_space<vmem>>, vector<256x128xbf16>
    %cst = arith.constant dense<0.000000e+00> : vector<256x128xf32>
    %6 = tpu.matmul %4, %5, %cst {dimension_numbers = #tpu.dot_dimension_numbers<[1], [0], [0], [1], [0, 0, 1, 1], [], []>} : vector<256x256xbf16>, vector<256x128xbf16>, vector<256x128xf32> -> vector<256x128xf32>
    %7 = arith.addf %3, %6 : vector<256x128xf32>
    %c0_6 = arith.constant 0 : index
    %c0_7 = arith.constant 0 : index
    %8 = vector.load %arg7[%c0_6, %c0_7] : memref<256x128xf32, #tpu.memory_space<vmem>>, vector<256x128xf32>
    tpu.vector_store %arg7[%c0_6, %c0_7], %7 {strides = array<i32>} : memref<256x128xf32, #tpu.memory_space<vmem>>, vector<256x128xf32>,
    %c1_i32 = arith.constant 1 : i32
    %9 = arith.cmpi eq, %arg1, %c1_i32 : i32
    %10 = arith.extui %9 : i1 to i32
    %c0_i32_8 = arith.constant 0 : i32
    %11 = arith.cmpi ne, %10, %c0_i32_8 : i32
    scf.if %11 {
      %c0_9 = arith.constant 0 : index
      %c0_10 = arith.constant 0 : index
      %12 = vector.load %arg7[%c0_9, %c0_10] : memref<256x128xf32, #tpu.memory_space<vmem>>, vector<256x128xf32>
      %13 = arith.truncf %12 : vector<256x128xf32> to vector<256x128xbf16>
      %c0_11 = arith.constant 0 : index
      %c0_12 = arith.constant 0 : index
      %14 = vector.load %arg4[%c0_11, %c0_12] : memref<128x128xbf16, #tpu.memory_space<vmem>>, vector<128x128xbf16>
      %cst_13 = arith.constant dense<0.000000e+00> : vector<256x128xf32>
      %15 = tpu.matmul %13, %14, %cst_13 {dimension_numbers = #tpu.dot_dimension_numbers<[1], [0], [0], [1], [0, 0, 1, 1], [], []>} : vector<256x128xbf16>, vector<128x128xbf16>, vector<256x128xf32> -> vector<256x128xf32>
      %c0_14 = arith.constant 0 : index
      %c0_15 = arith.constant 0 : index
      %16 = vector.load %arg5[%c0_14, %c0_15] : memref<1x128xf32, #tpu.memory_space<vmem>>, vector<1x128xf32>
      %17 = vector.broadcast %16 : vector<1x128xf32> to vector<256x128xf32>
      %18 = arith.addf %15, %17 : vector<256x128xf32>
      %c0_16 = arith.constant 0 : index
      %c0_17 = arith.constant 0 : index
      %19 = vector.load %arg6[%c0_16, %c0_17] : memref<256x128xf32, #tpu.memory_space<vmem>>, vector<256x128xf32>
      tpu.vector_store %arg6[%c0_16, %c0_17], %18 {strides = array<i32>} : memref<256x128xf32, #tpu.memory_space<vmem>>, vector<256x128xf32>,
    } else {
    }
    return
  }
  func.func @transform_0(%arg0: i32, %arg1: i32) -> (i32, i32) {
    %c0_i32 = arith.constant 0 : i32
    return %arg0, %arg1 : i32, i32
  }
  func.func @transform_1(%arg0: i32, %arg1: i32) -> (i32, i32) {
    %c0_i32 = arith.constant 0 : i32
    %c0_i32_0 = arith.constant 0 : i32
    return %arg1, %c0_i32 : i32, i32
  }
  func.func @transform_2(%arg0: i32, %arg1: i32) -> (i32, i32) {
    %c0_i32 = arith.constant 0 : i32
    %c0_i32_0 = arith.constant 0 : i32
    %c0_i32_1 = arith.constant 0 : i32
    return %c0_i32, %c0_i32_0 : i32, i32
  }
  func.func @transform_3(%arg0: i32, %arg1: i32) -> (i32, i32) {
    %c0_i32 = arith.constant 0 : i32
    %c0_i32_0 = arith.constant 0 : i32
    %c0_i32_1 = arith.constant 0 : i32
    return %c0_i32, %c0_i32_0 : i32, i32
  }
  func.func @transform_4(%arg0: i32, %arg1: i32) -> (i32, i32) {
    %c0_i32 = arith.constant 0 : i32
    %c0_i32_0 = arith.constant 0 : i32
    return %arg0, %c0_i32 : i32, i32
  }
}

module attributes {stable_mosaic.version = 11 : i64} {
  func.func @gcn_layer_kernel(%arg0: i32, %arg1: i32, %arg2: memref<256x256xbf16, #tpu.memory_space<vmem>>, %arg3: memref<256x128xbf16, #tpu.memory_space<vmem>>, %arg4: memref<128x128xbf16, #tpu.memory_space<vmem>>, %arg5: memref<1x128xf32, #tpu.memory_space<vmem>>, %arg6: memref<256x128xbf16, #tpu.memory_space<vmem>>, %arg7: memref<256x128xf32, #tpu.memory_space<vmem>>) attributes {dimension_semantics = [#tpu.dimension_semantics<parallel>, #tpu.dimension_semantics<arbitrary>], iteration_bounds = array<i64: 2, 2>, scalar_prefetch = 0 : i64, scratch_operands = 1 : i64, tpu.core_type = #tpu.core_type<tc>, window_params = [{transform_indices = @transform_0, window_bounds = array<i64: 256, 256>}, {transform_indices = @transform_1, window_bounds = array<i64: 256, 128>}, {pipeline_mode = #tpu.pipeline_mode<synchronous>, transform_indices = @transform_2, window_bounds = array<i64: 128, 128>}, {pipeline_mode = #tpu.pipeline_mode<synchronous>, transform_indices = @transform_3, window_bounds = array<i64: 1, 128>}, {transform_indices = @transform_4, window_bounds = array<i64: 256, 128>}]} {
    %c0_i32 = arith.constant 0 : i32
    %0 = arith.cmpi eq, %arg1, %c0_i32 : i32
    %1 = arith.extui %0 : i1 to i32
    %c0_i32_0 = arith.constant 0 : i32
    %2 = arith.cmpi ne, %1, %c0_i32_0 : i32
    scf.if %2 {
      %cst_9 = arith.constant 0.000000e+00 : f32
      %12 = vector.broadcast %cst_9 : f32 to vector<256x128xf32>
      %c0_10 = arith.constant 0 : index
      %c0_11 = arith.constant 0 : index
      %13 = vector.load %arg7[%c0_10, %c0_11] : memref<256x128xf32, #tpu.memory_space<vmem>>, vector<256x128xf32>
      tpu.vector_store %arg7[%c0_10, %c0_11], %12 {strides = array<i32>} : memref<256x128xf32, #tpu.memory_space<vmem>>, vector<256x128xf32>,
    } else {
    }
    %c0 = arith.constant 0 : index
    %c0_1 = arith.constant 0 : index
    %3 = vector.load %arg7[%c0, %c0_1] : memref<256x128xf32, #tpu.memory_space<vmem>>, vector<256x128xf32>
    %c0_2 = arith.constant 0 : index
    %c0_3 = arith.constant 0 : index
    %4 = vector.load %arg2[%c0_2, %c0_3] : memref<256x256xbf16, #tpu.memory_space<vmem>>, vector<256x256xbf16>
    %c0_4 = arith.constant 0 : index
    %c0_5 = arith.constant 0 : index
    %5 = vector.load %arg3[%c0_4, %c0_5] : memref<256x128xbf16, #tpu.memory_space<vmem>>, vector<256x128xbf16>
    %cst = arith.constant dense<0.000000e+00> : vector<256x128xf32>
    %6 = tpu.matmul %4, %5, %cst {dimension_numbers = #tpu.dot_dimension_numbers<[1], [0], [0], [1], [0, 0, 1, 1], [], []>} : vector<256x256xbf16>, vector<256x128xbf16>, vector<256x128xf32> -> vector<256x128xf32>
    %7 = arith.addf %3, %6 : vector<256x128xf32>
    %c0_6 = arith.constant 0 : index
    %c0_7 = arith.constant 0 : index
    %8 = vector.load %arg7[%c0_6, %c0_7] : memref<256x128xf32, #tpu.memory_space<vmem>>, vector<256x128xf32>
    tpu.vector_store %arg7[%c0_6, %c0_7], %7 {strides = array<i32>} : memref<256x128xf32, #tpu.memory_space<vmem>>, vector<256x128xf32>,
    %c1_i32 = arith.constant 1 : i32
    %9 = arith.cmpi eq, %arg1, %c1_i32 : i32
    %10 = arith.extui %9 : i1 to i32
    %c0_i32_8 = arith.constant 0 : i32
    %11 = arith.cmpi ne, %10, %c0_i32_8 : i32
    scf.if %11 {
      %c0_9 = arith.constant 0 : index
      %c0_10 = arith.constant 0 : index
      %12 = vector.load %arg7[%c0_9, %c0_10] : memref<256x128xf32, #tpu.memory_space<vmem>>, vector<256x128xf32>
      %13 = arith.truncf %12 : vector<256x128xf32> to vector<256x128xbf16>
      %c0_11 = arith.constant 0 : index
      %c0_12 = arith.constant 0 : index
      %14 = vector.load %arg4[%c0_11, %c0_12] : memref<128x128xbf16, #tpu.memory_space<vmem>>, vector<128x128xbf16>
      %cst_13 = arith.constant dense<0.000000e+00> : vector<256x128xf32>
      %15 = tpu.matmul %13, %14, %cst_13 {dimension_numbers = #tpu.dot_dimension_numbers<[1], [0], [0], [1], [0, 0, 1, 1], [], []>} : vector<256x128xbf16>, vector<128x128xbf16>, vector<256x128xf32> -> vector<256x128xf32>
      %c0_14 = arith.constant 0 : index
      %c0_15 = arith.constant 0 : index
      %16 = vector.load %arg5[%c0_14, %c0_15] : memref<1x128xf32, #tpu.memory_space<vmem>>, vector<1x128xf32>
      %17 = vector.broadcast %16 : vector<1x128xf32> to vector<256x128xf32>
      %18 = arith.addf %15, %17 : vector<256x128xf32>
      %cst_16 = arith.constant 0.000000e+00 : f32
      %19 = vector.broadcast %cst_16 : f32 to vector<256x128xf32>
      %20 = arith.maximumf %18, %19 : vector<256x128xf32>
      %21 = arith.truncf %20 : vector<256x128xf32> to vector<256x128xbf16>
      %c0_17 = arith.constant 0 : index
      %c0_18 = arith.constant 0 : index
      %22 = vector.load %arg6[%c0_17, %c0_18] : memref<256x128xbf16, #tpu.memory_space<vmem>>, vector<256x128xbf16>
      tpu.vector_store %arg6[%c0_17, %c0_18], %21 {strides = array<i32>} : memref<256x128xbf16, #tpu.memory_space<vmem>>, vector<256x128xbf16>,
    } else {
    }
    return
  }
  func.func @transform_0(%arg0: i32, %arg1: i32) -> (i32, i32) {
    %c0_i32 = arith.constant 0 : i32
    return %arg0, %arg1 : i32, i32
  }
  func.func @transform_1(%arg0: i32, %arg1: i32) -> (i32, i32) {
    %c0_i32 = arith.constant 0 : i32
    %c0_i32_0 = arith.constant 0 : i32
    return %arg1, %c0_i32 : i32, i32
  }
  func.func @transform_2(%arg0: i32, %arg1: i32) -> (i32, i32) {
    %c0_i32 = arith.constant 0 : i32
    %c0_i32_0 = arith.constant 0 : i32
    %c0_i32_1 = arith.constant 0 : i32
    return %c0_i32, %c0_i32_0 : i32, i32
  }
  func.func @transform_3(%arg0: i32, %arg1: i32) -> (i32, i32) {
    %c0_i32 = arith.constant 0 : i32
    %c0_i32_0 = arith.constant 0 : i32
    %c0_i32_1 = arith.constant 0 : i32
    return %c0_i32, %c0_i32_0 : i32, i32
  }
  func.func @transform_4(%arg0: i32, %arg1: i32) -> (i32, i32) {
    %c0_i32 = arith.constant 0 : i32
    %c0_i32_0 = arith.constant 0 : i32
    return %arg0, %c0_i32 : i32, i32
  }
}

</mosaic_0001>

<llo_original>
// kernel: gnn_forward.3
$region0: #{gnn_forward.3}
  #allocation0 [shape = 'u32[]', space=smem, size = 0x4, offset = 0x4, fixed_abs, tag = 'smem constant byte address 0x4 - core index']
  #allocation1 [shape = 'u32[144,128]{1,0:T(1,128)}', space=vmem, size = 0x12000, scoped, tag = 'internal scratch']
  #allocation2 [shape = 'f32[256,128]{1,0:T(8,128)}', space=vmem, size = 0x20000, scoped, tag = 'scratch operand']
  %s0 = inlined_call_operand.vmem [shape: bf16[512,512], index: 0, kind: input, shape index: {}]
  %s1 = inlined_call_operand.vmem [shape: bf16[512,128], index: 1, kind: input, shape index: {}]
  %s2 = inlined_call_operand.vmem [shape: bf16[128,128], index: 2, kind: input, shape index: {}]
  %s3 = inlined_call_operand.vmem [shape: f32[1,128], index: 3, kind: input, shape index: {}]
  %s4 = inlined_call_operand.vmem [shape: f32[512,128], index: 4, kind: output, shape index: {}]
  %s5 = sld [smem:[#allocation0]]
  $region95: #{gnn_forward.3} parent=0
    _
  %s7 = ssub.s32 1, %s5
  %s8 = scalar_select 0, %s7, %s5
  $region1: #{gnn_forward.3} parent=0
    #allocation3 [shape = 'u8[262144]{0}', space=vmem, size = 0x40000, scoped, tag = 'input window, operand 0']
    loop: start=0, step=1, limit=6
    $region2: #{gnn_forward.3} parent=1 // loop_pre_header
      _
    $region3: #{gnn_forward.3} parent=1 // loop_header
      %s10 = sphi 0, %s14
      %p11 = scmp.ge.s32.totalorder %s10, 6
      %s17 = sphi 0, %s29
      %s18 = sphi 0, %s25
      %s19 = sphi 0, %s17
      %s20 = sphi 0, %s18
      %s21 = sphi 0, %s19
      %s22 = sphi 0, %s20
      %s34 = sphi 0, %s36
      %s37 = sphi 0, %s34
      %s38 = sphi 0, %s37
      %s54 = sphi 0, %s38
      %s60 = sphi 0, %s62
      %s63 = sphi 0, %s60
      %s64 = sphi 0, %s63
      %s80 = sphi 0, %s64
      %s84 = sphi 0, %s84
      %s86 = sphi 0, %s84
      %s87 = sphi 0, %s86
      %s101 = sphi 0, %s87
      %s105 = sphi 0, %s105
      %s107 = sphi 0, %s105
      %s108 = sphi 0, %s107
      %s122 = sphi 0, %s108
      %s128 = sphi 0, %s130
      %s131 = sphi 0, %s128
      %s132 = sphi 0, %s131
      %s148 = sphi 0, %s132
    $region4: #{gnn_forward.3} parent=1 // loop_header_branch
      %13 = sbr.rel (%p11) target = $region8
    $region5: #{gnn_forward.3} parent=1 // loop_body
      %s15 = ssub.s32 %s10, 1
      %s16 = ssub.s32 %s10, 2
      %s23 = sadd.s32 1, %s18
      %p24 = scmp.ge.s32.totalorder %s23, 2
      %s25 = scalar_select %p24, 0, %s23
      %s26 = sadd.s32 1, %s17
      %s27 = scalar_select %p24, %s26, %s17
      %p28 = scmp.ge.s32.totalorder %s27, 2
      %s29 = scalar_select %p28, 0, %s27
      %s30 = ssub.s32 %s17, %s29
      %s31 = ssub.s32 %s18, %s25
      %s32 = sor.u32 %s30, %s31
      %p33 = scmp.eq.s32.totalorder %s32, 0
      %s35 = sadd.s32 %s34, 1
      %s36 = scalar_select %p33, %s34, %s35
      %p39 = pneg %p33
      %p40 = scmp.eq.s32.totalorder %s10, 3
      %p41 = por %p39, %p40
      %p42 = scmp.ne.s32.totalorder %s34, %s37
      %p43 = scmp.eq.s32.totalorder %s10, 0
      %p44 = por %p42, %p43
      %p45 = scmp.ne.s32.totalorder %s34, %s37
      %p46 = scmp.eq.s32.totalorder %s15, 3
      %p47 = por %p45, %p46
      %p48 = scmp.ne.s32.totalorder %s37, %s38
      %p49 = scmp.eq.s32.totalorder %s15, 0
      %p50 = por %p48, %p49
      %p51 = scmp.ne.s32.totalorder %s37, %s38
      %p52 = scmp.eq.s32.totalorder %s16, 3
      %p53 = por %p51, %p52
      %p55 = scmp.ne.s32.totalorder %s38, %s54
      %p56 = scmp.eq.s32.totalorder %s16, 0
      %p57 = por %p55, %p56
      %s58 = ssub.s32 %s18, %s25
      %p59 = scmp.eq.s32.totalorder %s58, 0
      %s61 = sadd.s32 %s60, 1
      %s62 = scalar_select %p59, %s60, %s61
      %p65 = pneg %p59
      %p66 = scmp.eq.s32.totalorder %s10, 3
      %p67 = por %p65, %p66
      %p68 = scmp.ne.s32.totalorder %s60, %s63
      %p69 = scmp.eq.s32.totalorder %s10, 0
      %p70 = por %p68, %p69
      %p71 = scmp.ne.s32.totalorder %s60, %s63
      %p72 = scmp.eq.s32.totalorder %s15, 3
      %p73 = por %p71, %p72
      %p74 = scmp.ne.s32.totalorder %s63, %s64
      %p75 = scmp.eq.s32.totalorder %s15, 0
      %p76 = por %p74, %p75
      %p77 = scmp.ne.s32.totalorder %s63, %s64
      %p78 = scmp.eq.s32.totalorder %s16, 3
      %p79 = por %p77, %p78
      %p81 = scmp.ne.s32.totalorder %s64, %s80
      %p82 = scmp.eq.s32.totalorder %s16, 0
      %p83 = por %p81, %p82
      %s85 = sadd.s32 %s84, 1
      %p88 = scmp.eq.s32.totalorder %s10, 3
      %p89 = scmp.ne.s32.totalorder %s84, %s86
      %p90 = scmp.eq.s32.totalorder %s10, 0
      %p91 = por %p89, %p90
      %p92 = scmp.ne.s32.totalorder %s84, %s86
      %p93 = scmp.eq.s32.totalorder %s15, 3
      %p94 = por %p92, %p93
      %p95 = scmp.ne.s32.totalorder %s86, %s87
      %p96 = scmp.eq.s32.totalorder %s15, 0
      %p97 = por %p95, %p96
      %p98 = scmp.ne.s32.totalorder %s86, %s87
      %p99 = scmp.eq.s32.totalorder %s16, 3
      %p100 = por %p98, %p99
      %p102 = scmp.ne.s32.totalorder %s87, %s101
      %p103 = scmp.eq.s32.totalorder %s16, 0
      %p104 = por %p102, %p103
      %s106 = sadd.s32 %s105, 1
      %p109 = scmp.eq.s32.totalorder %s10, 3
      %p110 = scmp.ne.s32.totalorder %s105, %s107
      %p111 = scmp.eq.s32.totalorder %s10, 0
      %p112 = por %p110, %p111
      %p113 = scmp.ne.s32.totalorder %s105, %s107
      %p114 = scmp.eq.s32.totalorder %s15, 3
      %p115 = por %p113, %p114
      %p116 = scmp.ne.s32.totalorder %s107, %s108
      %p117 = scmp.eq.s32.totalorder %s15, 0
      %p118 = por %p116, %p117
      %p119 = scmp.ne.s32.totalorder %s107, %s108
      %p120 = scmp.eq.s32.totalorder %s16, 3
      %p121 = por %p119, %p120
      %p123 = scmp.ne.s32.totalorder %s108, %s122
      %p124 = scmp.eq.s32.totalorder %s16, 0
      %p125 = por %p123, %p124
      %s126 = ssub.s32 %s17, %s29
      %p127 = scmp.eq.s32.totalorder %s126, 0
      %s129 = sadd.s32 %s128, 1
      %s130 = scalar_select %p127, %s128, %s129
      %p133 = pneg %p127
      %p134 = scmp.eq.s32.totalorder %s10, 3
      %p135 = por %p133, %p134
      %p136 = scmp.ne.s32.totalorder %s128, %s131
      %p137 = scmp.eq.s32.totalorder %s10, 0
      %p138 = por %p136, %p137
      %p139 = scmp.ne.s32.totalorder %s128, %s131
      %p140 = scmp.eq.s32.totalorder %s15, 3
      %p141 = por %p139, %p140
      %p142 = scmp.ne.s32.totalorder %s131, %s132
      %p143 = scmp.eq.s32.totalorder %s15, 0
      %p144 = por %p142, %p143
      %p145 = scmp.ne.s32.totalorder %s131, %s132
      %p146 = scmp.eq.s32.totalorder %s16, 3
      %p147 = por %p145, %p146
      %p149 = scmp.ne.s32.totalorder %s132, %s148
      %p150 = scmp.eq.s32.totalorder %s16, 0
      %p151 = por %p149, %p150
      %p152 = scmp.le.s32.totalorder 1, %s10
      %p153 = scmp.lt.s32.totalorder %s10, 5
      %p154 = pnand %p152, %p153
      %p155 = pneg %p154
      // Predicated region
      $region9: #{gnn_forward.3} parent=5 // pred_check
        _
      $region10: #{gnn_forward.3} parent=5 // pred_check_branch
        %157 = sbr.rel (%p154) target = $region12
      $region11: #{gnn_forward.3} parent=5 // pred_region
        %s158 = ssub.s32 %s10, 1
        // Predicated region
        $region13: #{gnn_forward.3} parent=11 // pred_check
          %p159 = pneg %p97
        $region14: #{gnn_forward.3} parent=11 // pred_check_branch
          %161 = sbr.rel (%p159) target = $region16
        $region15: #{gnn_forward.3} parent=11 // pred_region
          _
        $region16: #{gnn_forward.3} parent=11 // pred_fallthru
          _
        // Predicated region
        $region17: #{gnn_forward.3} parent=11 // pred_check
          %p162 = pneg %p118
        $region18: #{gnn_forward.3} parent=11 // pred_check_branch
          %164 = sbr.rel (%p162) target = $region20
        $region19: #{gnn_forward.3} parent=11 // pred_region
          _
        $region20: #{gnn_forward.3} parent=11 // pred_fallthru
          _
      $region12: #{gnn_forward.3} parent=5 // pred_fallthru
        _
      %p165 = scmp.lt.s32.totalorder %s10, 4
      // Predicated region
      $region21: #{gnn_forward.3} parent=5 // pred_check
        %p166 = pneg %p165
      $region22: #{gnn_forward.3} parent=5 // pred_check_branch
        %168 = sbr.rel (%p166) target = $region24
      $region23: #{gnn_forward.3} parent=5 // pred_region
        // Predicated region
        $region25: #{gnn_forward.3} parent=23 // pred_check
          %p169 = pneg %p44
        $region26: #{gnn_forward.3} parent=23 // pred_check_branch
          %171 = sbr.rel (%p169) target = $region28
        $region27: #{gnn_forward.3} parent=23 // pred_region
          %s172 = sand.u32 %s34, 1
          %s173 = sand.u32 %s34, 1
          %s174 = smul.addr %s173, 256
          %s175 = scalar_lea.vmem [#allocation3], %s174
          %s176 = smul.u32 32, %s17
          %s177 = smul.u32 2, %s18
          %s178 = smul.addr %s176, 4
          %s179 = sadd.s32 %s177, %s178
          %s180 = smul.addr %s179, 4
          %s181 = scalar_lea.vmem %s0, %s180
          // Predicated region
          $region29: #{gnn_forward.3} parent=27 // pred_check
            _
          $region30: #{gnn_forward.3} parent=27 // pred_check_branch
            %183 = sbr.rel (0) target = $region32
          $region31: #{gnn_forward.3} parent=27 // pred_region
            // Predicated region
            $region33: #{gnn_forward.3} parent=31 // pred_check
              _
            $region34: #{gnn_forward.3} parent=31 // pred_check_branch
              %185 = sbr.rel (0) target = $region36
            $region35: #{gnn_forward.3} parent=31 // pred_region
              // Predicated region
              $region48: #{gnn_forward.3} parent=35 // pred_check
                _
              $region49: #{gnn_forward.3} parent=35 // pred_check_branch
                %262 = sbr.rel (0) target = $region51
              $region50: #{gnn_forward.3} parent=35 // pred_region
                loop: start=0, step=1, limit=1
                $region52: #{gnn_forward.3} parent=50 // loop_pre_header
                  _
                $region53: #{gnn_forward.3} parent=50 // loop_header
                  %s264 = sphi 0, %s268
                  %p265 = scmp.ge.s32.totalorder %s264, 1
                  %s269 = sphi %s181, %s181
                  %s270 = sphi %s175, %s175
                $region54: #{gnn_forward.3} parent=50 // loop_header_branch
                  %267 = sbr.rel (%p265) target = $region58
                $region55: #{gnn_forward.3} parent=50 // loop_body
                  %v271 = vld [vmem:[%s269] sm:$0xff]
                  %272 = vst [vmem:[%s270] sm:$0xff] %v271
                  %v273 = vld [vmem:[%s269 + $0x10] sm:$0xff]
                  %274 = vst [vmem:[%s270 + $0x8] sm:$0xff] %v273
                  %v275 = vld [vmem:[%s269 + $0x20] sm:$0xff]
                  %276 = vst [vmem:[%s270 + $0x10] sm:$0xff] %v275
                  %v277 = vld [vmem:[%s269 + $0x30] sm:$0xff]
                  %278 = vst [vmem:[%s270 + $0x18] sm:$0xff] %v277
                  %v279 = vld [vmem:[%s269 + $0x40] sm:$0xff]
                  %280 = vst [vmem:[%s270 + $0x20] sm:$0xff] %v279
                  %v281 = vld [vmem:[%s269 + $0x50] sm:$0xff]
                  %282 = vst [vmem:[%s270 + $0x28] sm:$0xff] %v281
                  %v283 = vld [vmem:[%s269 + $0x60] sm:$0xff]
                  %284 = vst [vmem:[%s270 + $0x30] sm:$0xff] %v283
                  %v285 = vld [vmem:[%s269 + $0x70] sm:$0xff]
                  %286 = vst [vmem:[%s270 + $0x38] sm:$0xff] %v285
                  %v287 = vld [vmem:[%s269 + $0x80] sm:$0xff]
                  %288 = vst [vmem:[%s270 + $0x40] sm:$0xff] %v287
                  %v289 = vld [vmem:[%s269 + $0x90] sm:$0xff]
                  %290 = vst [vmem:[%s270 + $0x48] sm:$0xff] %v289
                  %v291 = vld [vmem:[%s269 + $0xa0] sm:$0xff]
                  %292 = vst [vmem:[%s270 + $0x50] sm:$0xff] %v291
                  %v293 = vld [vmem:[%s269 + $0xb0] sm:$0xff]
                  %294 = vst [vmem:[%s270 + $0x58] sm:$0xff] %v293
                  %v295 = vld [vmem:[%s269 + $0xc0] sm:$0xff]
                  %296 = vst [vmem:[%s270 + $0x60] sm:$0xff] %v295
                  %v297 = vld [vmem:[%s269 + $0xd0] sm:$0xff]
                  %298 = vst [vmem:[%s270 + $0x68] sm:$0xff] %v297
                  %v299 = vld [vmem:[%s269 + $0xe0] sm:$0xff]
                  %300 = vst [vmem:[%s270 + $0x70] sm:$0xff] %v299
                  %v301 = vld [vmem:[%s269 + $0xf0] sm:$0xff]
                  %302 = vst [vmem:[%s270 + $0x78] sm:$0xff] %v301
                  %v303 = vld [vmem:[%s269 + $0x100] sm:$0xff]
                  %304 = vst [vmem:[%s270 + $0x80] sm:$0xff] %v303
                  %v305 = vld [vmem:[%s269 + $0x110] sm:$0xff]
                  %306 = vst [vmem:[%s270 + $0x88] sm:$0xff] %v305
                  %v307 = vld [vmem:[%s269 + $0x120] sm:$0xff]
                  %308 = vst [vmem:[%s270 + $0x90] sm:$0xff] %v307
                  %v309 = vld [vmem:[%s269 + $0x130] sm:$0xff]
                  %310 = vst [vmem:[%s270 + $0x98] sm:$0xff] %v309
                  %v311 = vld [vmem:[%s269 + $0x140] sm:$0xff]
                  %312 = vst [vmem:[%s270 + $0xa0] sm:$0xff] %v311
                  %v313 = vld [vmem:[%s269 + $0x150] sm:$0xff]
                  %314 = vst [vmem:[%s270 + $0xa8] sm:$0xff] %v313
                  %v315 = vld [vmem:[%s269 + $0x160] sm:$0xff]
                  %316 = vst [vmem:[%s270 + $0xb0] sm:$0xff] %v315
                  %v317 = vld [vmem:[%s269 + $0x170] sm:$0xff]
                  %318 = vst [vmem:[%s270 + $0xb8] sm:$0xff] %v317
                  %v319 = vld [vmem:[%s269 + $0x180] sm:$0xff]
                  %320 = vst [vmem:[%s270 + $0xc0] sm:$0xff] %v319
                  %v321 = vld [vmem:[%s269 + $0x190] sm:$0xff]
                  %322 = vst [vmem:[%s270 + $0xc8] sm:$0xff] %v321
                  %v323 = vld [vmem:[%s269 + $0x1a0] sm:$0xff]
                  %324 = vst [vmem:[%s270 + $0xd0] sm:$0xff] %v323
                  %v325 = vld [vmem:[%s269 + $0x1b0] sm:$0xff]
                  %326 = vst [vmem:[%s270 + $0xd8] sm:$0xff] %v325
                  %v327 = vld [vmem:[%s269 + $0x1c0] sm:$0xff]
                  %328 = vst [vmem:[%s270 + $0xe0] sm:$0xff] %v327
                  %v329 = vld [vmem:[%s269 + $0x1d0] sm:$0xff]
                  %330 = vst [vmem:[%s270 + $0xe8] sm:$0xff] %v329
                  %v331 = vld [vmem:[%s269 + $0x1e0] sm:$0xff]
                  %332 = vst [vmem:[%s270 + $0xf0] sm:$0xff] %v331
                  %v333 = vld [vmem:[%s269 + $0x1f0] sm:$0xff]
                  %334 = vst [vmem:[%s270 + $0xf8] sm:$0xff] %v333
                $region56: #{gnn_forward.3} parent=50 // loop_footer
                  %s268 = sadd.s32 1, %s264
                $region57: #{gnn_forward.3} parent=50 // loop_footer_branch
                  %263 = sbr.rel target = $region53
                $region58: #{gnn_forward.3} parent=50 // loop_exit
                  _
              $region51: #{gnn_forward.3} parent=35 // pred_fallthru
                _
              // Predicated region
              $region59: #{gnn_forward.3} parent=35 // pred_check
                _
              $region60: #{gnn_forward.3} parent=35 // pred_check_branch
                %336 = sbr.rel target = $region62
              $region61: #{gnn_forward.3} parent=35 // pred_region
                _
              $region62: #{gnn_forward.3} parent=35 // pred_fallthru
                _
            $region36: #{gnn_forward.3} parent=31 // pred_fallthru
              _
            // Predicated region
            $region37: #{gnn_forward.3} parent=31 // pred_check
              _
            $region38: #{gnn_forward.3} parent=31 // pred_check_branch
              %187 = sbr.rel target = $region40
            $region39: #{gnn_forward.3} parent=31 // pred_region
              loop: start=0, step=1, limit=1
              $region41: #{gnn_forward.3} parent=39 // loop_pre_header
                _
              $region42: #{gnn_forward.3} parent=39 // loop_header
                %s190 = sphi 0, %s194
                %p191 = scmp.ge.s32.totalorder %s190, 1
                %s195 = sphi %s181, %s181
                %s196 = sphi %s175, %s175
              $region43: #{gnn_forward.3} parent=39 // loop_header_branch
                %193 = sbr.rel (%p191) target = $region47
              $region44: #{gnn_forward.3} parent=39 // loop_body
                %v197 = vld [vmem:[%s195] sm:$0xff]
                %198 = vst [vmem:[%s196] sm:$0xff] %v197
                %v199 = vld [vmem:[%s195 + $0x10] sm:$0xff]
                %200 = vst [vmem:[%s196 + $0x8] sm:$0xff] %v199
                %v201 = vld [vmem:[%s195 + $0x20] sm:$0xff]
                %202 = vst [vmem:[%s196 + $0x10] sm:$0xff] %v201
                %v203 = vld [vmem:[%s195 + $0x30] sm:$0xff]
                %204 = vst [vmem:[%s196 + $0x18] sm:$0xff] %v203
                %v205 = vld [vmem:[%s195 + $0x40] sm:$0xff]
                %206 = vst [vmem:[%s196 + $0x20] sm:$0xff] %v205
                %v207 = vld [vmem:[%s195 + $0x50] sm:$0xff]
                %208 = vst [vmem:[%s196 + $0x28] sm:$0xff] %v207
                %v209 = vld [vmem:[%s195 + $0x60] sm:$0xff]
                %210 = vst [vmem:[%s196 + $0x30] sm:$0xff] %v209
                %v211 = vld [vmem:[%s195 + $0x70] sm:$0xff]
                %212 = vst [vmem:[%s196 + $0x38] sm:$0xff] %v211
                %v213 = vld [vmem:[%s195 + $0x80] sm:$0xff]
                %214 = vst [vmem:[%s196 + $0x40] sm:$0xff] %v213
                %v215 = vld [vmem:[%s195 + $0x90] sm:$0xff]
                %216 = vst [vmem:[%s196 + $0x48] sm:$0xff] %v215
                %v217 = vld [vmem:[%s195 + $0xa0] sm:$0xff]
                %218 = vst [vmem:[%s196 + $0x50] sm:$0xff] %v217
                %v219 = vld [vmem:[%s195 + $0xb0] sm:$0xff]
                %220 = vst [vmem:[%s196 + $0x58] sm:$0xff] %v219
                %v221 = vld [vmem:[%s195 + $0xc0] sm:$0xff]
                %222 = vst [vmem:[%s196 + $0x60] sm:$0xff] %v221
                %v223 = vld [vmem:[%s195 + $0xd0] sm:$0xff]
                %224 = vst [vmem:[%s196 + $0x68] sm:$0xff] %v223
                %v225 = vld [vmem:[%s195 + $0xe0] sm:$0xff]
                %226 = vst [vmem:[%s196 + $0x70] sm:$0xff] %v225
                %v227 = vld [vmem:[%s195 + $0xf0] sm:$0xff]
                %228 = vst [vmem:[%s196 + $0x78] sm:$0xff] %v227
                %v229 = vld [vmem:[%s195 + $0x100] sm:$0xff]
                %230 = vst [vmem:[%s196 + $0x80] sm:$0xff] %v229
                %v231 = vld [vmem:[%s195 + $0x110] sm:$0xff]
                %232 = vst [vmem:[%s196 + $0x88] sm:$0xff] %v231
                %v233 = vld [vmem:[%s195 + $0x120] sm:$0xff]
                %234 = vst [vmem:[%s196 + $0x90] sm:$0xff] %v233
                %v235 = vld [vmem:[%s195 + $0x130] sm:$0xff]
                %236 = vst [vmem:[%s196 + $0x98] sm:$0xff] %v235
                %v237 = vld [vmem:[%s195 + $0x140] sm:$0xff]
                %238 = vst [vmem:[%s196 + $0xa0] sm:$0xff] %v237
                %v239 = vld [vmem:[%s195 + $0x150] sm:$0xff]
                %240 = vst [vmem:[%s196 + $0xa8] sm:$0xff] %v239
                %v241 = vld [vmem:[%s195 + $0x160] sm:$0xff]
                %242 = vst [vmem:[%s196 + $0xb0] sm:$0xff] %v241
                %v243 = vld [vmem:[%s195 + $0x170] sm:$0xff]
                %244 = vst [vmem:[%s196 + $0xb8] sm:$0xff] %v243
                %v245 = vld [vmem:[%s195 + $0x180] sm:$0xff]
                %246 = vst [vmem:[%s196 + $0xc0] sm:$0xff] %v245
                %v247 = vld [vmem:[%s195 + $0x190] sm:$0xff]
                %248 = vst [vmem:[%s196 + $0xc8] sm:$0xff] %v247
                %v249 = vld [vmem:[%s195 + $0x1a0] sm:$0xff]
                %250 = vst [vmem:[%s196 + $0xd0] sm:$0xff] %v249
                %v251 = vld [vmem:[%s195 + $0x1b0] sm:$0xff]
                %252 = vst [vmem:[%s196 + $0xd8] sm:$0xff] %v251
                %v253 = vld [vmem:[%s195 + $0x1c0] sm:$0xff]
                %254 = vst [vmem:[%s196 + $0xe0] sm:$0xff] %v253
                %v255 = vld [vmem:[%s195 + $0x1d0] sm:$0xff]
                %256 = vst [vmem:[%s196 + $0xe8] sm:$0xff] %v255
                %v257 = vld [vmem:[%s195 + $0x1e0] sm:$0xff]
                %258 = vst [vmem:[%s196 + $0xf0] sm:$0xff] %v257
                %v259 = vld [vmem:[%s195 + $0x1f0] sm:$0xff]
                %260 = vst [vmem:[%s196 + $0xf8] sm:$0xff] %v259
              $region45: #{gnn_forward.3} parent=39 // loop_footer
                %s194 = sadd.s32 1, %s190
              $region46: #{gnn_forward.3} parent=39 // loop_footer_branch
                %189 = sbr.rel target = $region42
              $region47: #{gnn_forward.3} parent=39 // loop_exit
                _
            $region40: #{gnn_forward.3} parent=31 // pred_fallthru
              _
          $region32: #{gnn_forward.3} parent=27 // pred_fallthru
            _
          %337 = vnop
        $region28: #{gnn_forward.3} parent=23 // pred_fallthru
          _
        // Predicated region
        $region63: #{gnn_forward.3} parent=23 // pred_check
          %p338 = pneg %p70
        $region64: #{gnn_forward.3} parent=23 // pred_check_branch
          %340 = sbr.rel (%p338) target = $region66
        $region65: #{gnn_forward.3} parent=23 // pred_region
          %s341 = smul.u32 32, %s18
          %p342 = scmp.lt.s32.totalorder %s341, 63
          %s343 = scalar_select %p342, %s341, 63
          %s344 = smul.addr %s343, 4
          %s345 = scalar_lea.vmem %s1, %s344
          %s346 = smul.u32 32, %s18
        $region66: #{gnn_forward.3} parent=23 // pred_fallthru
          _
      $region24: #{gnn_forward.3} parent=5 // pred_fallthru
        _
      %p347 = scmp.le.s32.totalorder 1, %s10
      %p348 = scmp.lt.s32.totalorder %s10, 5
      %p349 = pnand %p347, %p348
      %p350 = pneg %p349
      // Predicated region
      $region67: #{gnn_forward.3} parent=5 // pred_check
        _
      $region68: #{gnn_forward.3} parent=5 // pred_check_branch
        %352 = sbr.rel (%p349) target = $region70
      $region69: #{gnn_forward.3} parent=5 // pred_region
        %s353 = ssub.s32 %s10, 1
        %s354 = sand.u32 %s37, 1
        %s355 = sand.u32 %s37, 1
        %s356 = smul.addr %s355, 256
        %s357 = scalar_lea.vmem [#allocation3], %s356
        // Predicated region
        $region71: #{gnn_forward.3} parent=69 // pred_check
          %p358 = pneg %p50
        $region72: #{gnn_forward.3} parent=69 // pred_check_branch
          %360 = sbr.rel (%p358) target = $region74
        $region73: #{gnn_forward.3} parent=69 // pred_region
          _
        $region74: #{gnn_forward.3} parent=69 // pred_fallthru
          _
        %s361 = sand.u32 %s37, 1
        %s362 = sand.u32 %s37, 1
        %s363 = smul.addr %s362, 256
        %s364 = scalar_lea.vmem [#allocation3], %s363
        %p365 = pneg %p50
        %p366 = pneg %p47
        %s367 = smul.u32 32, %s20
        %p368 = scmp.lt.s32.totalorder %s367, 63
        %s369 = scalar_select %p368, %s367, 63
        %s370 = smul.addr %s369, 4
        %s371 = scalar_lea.vmem %s1, %s370
        %p372 = pneg %p76
        %p373 = pneg %p73
        %p374 = pneg %p97
        %p375 = pneg %p94
        %p376 = pneg %p118
        %p377 = pneg %p115
        %p378 = pneg %p144
        %p379 = pneg %p141
        %s380 = smul.u32 32, %s19
        %p381 = scmp.lt.s32.totalorder %s380, 63
        %s382 = scalar_select %p381, %s380, 63
        %s383 = smul.addr %s382, 8
        %s384 = scalar_lea.vmem %s4, %s383
        %s385 = smul.u32 32, %s19
        %s386 = smul.u32 2, %s20
        %s387 = smul.u32 32, %s20
        %p388 = scmp.lt.s32.totalorder %s387, 63
        %s389 = scalar_select %p388, %s387, 63
        %s390 = smul.addr %s389, 4
        %s391 = scalar_lea.vmem %s1, %s390
        %s392 = smul.u32 32, %s20
        %s393 = smul.u32 32, %s19
        %p394 = scmp.lt.s32.totalorder %s393, 63
        %s395 = scalar_select %p394, %s393, 63
        %s396 = smul.addr %s395, 8
        %s397 = scalar_lea.vmem %s4, %s396
        %s398 = smul.u32 32, %s19
        %p400 = scmp.eq.s32.totalorder %s20, 0
        // Predicated region
        $region75: #{gnn_forward.3} parent=69 // pred_check
          %p401 = pneg %p400
        $region76: #{gnn_forward.3} parent=69 // pred_check_branch
          %403 = sbr.rel (%p401) target = $region78
        $region77: #{gnn_forward.3} parent=69 // pred_region
          %404 = vst [vmem:[#allocation2] sm:$0xff] 0.0
          %405 = vst [vmem:[#allocation2 + $0x8] sm:$0xff] 0.0
          %406 = vst [vmem:[#allocation2 + $0x10] sm:$0xff] 0.0
          %407 = vst [vmem:[#allocation2 + $0x18] sm:$0xff] 0.0
          %408 = vst [vmem:[#allocation2 + $0x20] sm:$0xff] 0.0
          %409 = vst [vmem:[#allocation2 + $0x28] sm:$0xff] 0.0
          %410 = vst [vmem:[#allocation2 + $0x30] sm:$0xff] 0.0
          %411 = vst [vmem:[#allocation2 + $0x38] sm:$0xff] 0.0
          %412 = vst [vmem:[#allocation2 + $0x40] sm:$0xff] 0.0
          %413 = vst [vmem:[#allocation2 + $0x48] sm:$0xff] 0.0
          %414 = vst [vmem:[#allocation2 + $0x50] sm:$0xff] 0.0
          %415 = vst [vmem:[#allocation2 + $0x58] sm:$0xff] 0.0
          %416 = vst [vmem:[#allocation2 + $0x60] sm:$0xff] 0.0
          %417 = vst [vmem:[#allocation2 + $0x68] sm:$0xff] 0.0
          %418 = vst [vmem:[#allocation2 + $0x70] sm:$0xff] 0.0
          %419 = vst [vmem:[#allocation2 + $0x78] sm:$0xff] 0.0
          %420 = vst [vmem:[#allocation2 + $0x80] sm:$0xff] 0.0
          %421 = vst [vmem:[#allocation2 + $0x88] sm:$0xff] 0.0
          %422 = vst [vmem:[#allocation2 + $0x90] sm:$0xff] 0.0
          %423 = vst [vmem:[#allocation2 + $0x98] sm:$0xff] 0.0
          %424 = vst [vmem:[#allocation2 + $0xa0] sm:$0xff] 0.0
          %425 = vst [vmem:[#allocation2 + $0xa8] sm:$0xff] 0.0
          %426 = vst [vmem:[#allocation2 + $0xb0] sm:$0xff] 0.0
          %427 = vst [vmem:[#allocation2 + $0xb8] sm:$0xff] 0.0
          %428 = vst [vmem:[#allocation2 + $0xc0] sm:$0xff] 0.0
          %429 = vst [vmem:[#allocation2 + $0xc8] sm:$0xff] 0.0
          %430 = vst [vmem:[#allocation2 + $0xd0] sm:$0xff] 0.0
          %431 = vst [vmem:[#allocation2 + $0xd8] sm:$0xff] 0.0
          %432 = vst [vmem:[#allocation2 + $0xe0] sm:$0xff] 0.0
          %433 = vst [vmem:[#allocation2 + $0xe8] sm:$0xff] 0.0
          %434 = vst [vmem:[#allocation2 + $0xf0] sm:$0xff] 0.0
          %435 = vst [vmem:[#allocation2 + $0xf8] sm:$0xff] 0.0
        $region78: #{gnn_forward.3} parent=69 // pred_fallthru
          _
        %v436 = vld [vmem:[#allocation2] sm:$0xff]
        %v437 = vld [vmem:[#allocation2 + $0x8] sm:$0xff]
        %v438 = vld [vmem:[#allocation2 + $0x10] sm:$0xff]
        %v439 = vld [vmem:[#allocation2 + $0x18] sm:$0xff]
        %v440 = vld [vmem:[#allocation2 + $0x20] sm:$0xff]
        %v441 = vld [vmem:[#allocation2 + $0x28] sm:$0xff]
        %v442 = vld [vmem:[#allocation2 + $0x30] sm:$0xff]
        %v443 = vld [vmem:[#allocation2 + $0x38] sm:$0xff]
        %v444 = vld [vmem:[#allocation2 + $0x40] sm:$0xff]
        %v445 = vld [vmem:[#allocation2 + $0x48] sm:$0xff]
        %v446 = vld [vmem:[#allocation2 + $0x50] sm:$0xff]
        %v447 = vld [vmem:[#allocation2 + $0x58] sm:$0xff]
        %v448 = vld [vmem:[#allocation2 + $0x60] sm:$0xff]
        %v449 = vld [vmem:[#allocation2 + $0x68] sm:$0xff]
        %v450 = vld [vmem:[#allocation2 + $0x70] sm:$0xff]
        %v451 = vld [vmem:[#allocation2 + $0x78] sm:$0xff]
        %v452 = vld [vmem:[#allocation2 + $0x80] sm:$0xff]
        %v453 = vld [vmem:[#allocation2 + $0x88] sm:$0xff]
        %v454 = vld [vmem:[#allocation2 + $0x90] sm:$0xff]
        %v455 = vld [vmem:[#allocation2 + $0x98] sm:$0xff]
        %v456 = vld [vmem:[#allocation2 + $0xa0] sm:$0xff]
        %v457 = vld [vmem:[#allocation2 + $0xa8] sm:$0xff]
        %v458 = vld [vmem:[#allocation2 + $0xb0] sm:$0xff]
        %v459 = vld [vmem:[#allocation2 + $0xb8] sm:$0xff]
        %v460 = vld [vmem:[#allocation2 + $0xc0] sm:$0xff]
        %v461 = vld [vmem:[#allocation2 + $0xc8] sm:$0xff]
        %v462 = vld [vmem:[#allocation2 + $0xd0] sm:$0xff]
        %v463 = vld [vmem:[#allocation2 + $0xd8] sm:$0xff]
        %v464 = vld [vmem:[#allocation2 + $0xe0] sm:$0xff]
        %v465 = vld [vmem:[#allocation2 + $0xe8] sm:$0xff]
        %v466 = vld [vmem:[#allocation2 + $0xf0] sm:$0xff]
        %v467 = vld [vmem:[#allocation2 + $0xf8] sm:$0xff]
        %v468 = vld [vmem:[%s357] sm:$0xff]
        %v469 = vld [vmem:[%s357 + $0x8] sm:$0xff]
        %v470 = vld [vmem:[%s357 + $0x10] sm:$0xff]
        %v471 = vld [vmem:[%s357 + $0x18] sm:$0xff]
        %v472 = vld [vmem:[%s357 + $0x20] sm:$0xff]
        %v473 = vld [vmem:[%s357 + $0x28] sm:$0xff]
        %v474 = vld [vmem:[%s357 + $0x30] sm:$0xff]
        %v475 = vld [vmem:[%s357 + $0x38] sm:$0xff]
        %v476 = vld [vmem:[%s357 + $0x40] sm:$0xff]
        %v477 = vld [vmem:[%s357 + $0x48] sm:$0xff]
        %v478 = vld [vmem:[%s357 + $0x50] sm:$0xff]
        %v479 = vld [vmem:[%s357 + $0x58] sm:$0xff]
        %v480 = vld [vmem:[%s357 + $0x60] sm:$0xff]
        %v481 = vld [vmem:[%s357 + $0x68] sm:$0xff]
        %v482 = vld [vmem:[%s357 + $0x70] sm:$0xff]
        %v483 = vld [vmem:[%s357 + $0x78] sm:$0xff]
        %v484 = vld [vmem:[%s357 + $0x80] sm:$0xff]
        %v485 = vld [vmem:[%s357 + $0x88] sm:$0xff]
        %v486 = vld [vmem:[%s357 + $0x90] sm:$0xff]
        %v487 = vld [vmem:[%s357 + $0x98] sm:$0xff]
        %v488 = vld [vmem:[%s357 + $0xa0] sm:$0xff]
        %v489 = vld [vmem:[%s357 + $0xa8] sm:$0xff]
        %v490 = vld [vmem:[%s357 + $0xb0] sm:$0xff]
        %v491 = vld [vmem:[%s357 + $0xb8] sm:$0xff]
        %v492 = vld [vmem:[%s357 + $0xc0] sm:$0xff]
        %v493 = vld [vmem:[%s357 + $0xc8] sm:$0xff]
        %v494 = vld [vmem:[%s357 + $0xd0] sm:$0xff]
        %v495 = vld [vmem:[%s357 + $0xd8] sm:$0xff]
        %v496 = vld [vmem:[%s357 + $0xe0] sm:$0xff]
        %v497 = vld [vmem:[%s357 + $0xe8] sm:$0xff]
        %v498 = vld [vmem:[%s357 + $0xf0] sm:$0xff]
        %v499 = vld [vmem:[%s357 + $0xf8] sm:$0xff]
        %v500 = vld [vmem:[%s391] sm:$0xf]
        %v501 = vld [vmem:[%s391 + $0x4] sm:$0xf]
        %v502 = vld [vmem:[%s391 + $0x8] sm:$0xf]
        %v503 = vld [vmem:[%s391 + $0xc] sm:$0xf]
        %v504 = vld [vmem:[%s391 + $0x10] sm:$0xf]
        %v505 = vld [vmem:[%s391 + $0x14] sm:$0xf]
        %v506 = vld [vmem:[%s391 + $0x18] sm:$0xf]
        %v507 = vld [vmem:[%s391 + $0x1c] sm:$0xf]
        %v508 = vld [vmem:[%s391 + $0x20] sm:$0xf]
        %v509 = vld [vmem:[%s391 + $0x24] sm:$0xf]
        %v510 = vld [vmem:[%s391 + $0x28] sm:$0xf]
        %v511 = vld [vmem:[%s391 + $0x2c] sm:$0xf]
        %v512 = vld [vmem:[%s391 + $0x30] sm:$0xf]
        %v513 = vld [vmem:[%s391 + $0x34] sm:$0xf]
        %v514 = vld [vmem:[%s391 + $0x38] sm:$0xf]
        %v515 = vld [vmem:[%s391 + $0x3c] sm:$0xf]
        %v516 = vld [vmem:[%s391 + $0x40] sm:$0xf]
        %v517 = vld [vmem:[%s391 + $0x44] sm:$0xf]
        %v518 = vld [vmem:[%s391 + $0x48] sm:$0xf]
        %v519 = vld [vmem:[%s391 + $0x4c] sm:$0xf]
        %v520 = vld [vmem:[%s391 + $0x50] sm:$0xf]
        %v521 = vld [vmem:[%s391 + $0x54] sm:$0xf]
        %v522 = vld [vmem:[%s391 + $0x58] sm:$0xf]
        %v523 = vld [vmem:[%s391 + $0x5c] sm:$0xf]
        %v524 = vld [vmem:[%s391 + $0x60] sm:$0xf]
        %v525 = vld [vmem:[%s391 + $0x64] sm:$0xf]
        %v526 = vld [vmem:[%s391 + $0x68] sm:$0xf]
        %v527 = vld [vmem:[%s391 + $0x6c] sm:$0xf]
        %v528 = vld [vmem:[%s391 + $0x70] sm:$0xf]
        %v529 = vld [vmem:[%s391 + $0x74] sm:$0xf]
        %v530 = vld [vmem:[%s391 + $0x78] sm:$0xf]
        %v531 = vld [vmem:[%s391 + $0x7c] sm:$0xf]
        %v564 = vunpack.c.l.b16 %v468
        %v565 = vunpack.c.h.b16 %v468
        %v566 = vunpack.c.l.b16 %v469
        %v567 = vunpack.c.h.b16 %v469
        %v568 = vunpack.c.l.b16 %v470
        %v569 = vunpack.c.h.b16 %v470
        %v570 = vunpack.c.l.b16 %v471
        %v571 = vunpack.c.h.b16 %v471
        %v572 = vunpack.c.l.b16 %v472
        %v573 = vunpack.c.h.b16 %v472
        %v574 = vunpack.c.l.b16 %v473
        %v575 = vunpack.c.h.b16 %v473
        %v576 = vunpack.c.l.b16 %v474
        %v577 = vunpack.c.h.b16 %v474
        %v578 = vunpack.c.l.b16 %v475
        %v579 = vunpack.c.h.b16 %v475
        %v580 = vunpack.c.l.b16 %v476
        %v581 = vunpack.c.h.b16 %v476
        %v582 = vunpack.c.l.b16 %v477
        %v583 = vunpack.c.h.b16 %v477
        %v584 = vunpack.c.l.b16 %v478
        %v585 = vunpack.c.h.b16 %v478
        %v586 = vunpack.c.l.b16 %v479
        %v587 = vunpack.c.h.b16 %v479
        %v588 = vunpack.c.l.b16 %v480
        %v589 = vunpack.c.h.b16 %v480
        %v590 = vunpack.c.l.b16 %v481
        %v591 = vunpack.c.h.b16 %v481
        %v592 = vunpack.c.l.b16 %v482
        %v593 = vunpack.c.h.b16 %v482
        %v594 = vunpack.c.l.b16 %v483
        %v595 = vunpack.c.h.b16 %v483
        %v596 = vunpack.c.l.b16 %v484
        %v597 = vunpack.c.h.b16 %v484
        %v598 = vunpack.c.l.b16 %v485
        %v599 = vunpack.c.h.b16 %v485
        %v600 = vunpack.c.l.b16 %v486
        %v601 = vunpack.c.h.b16 %v486
        %v602 = vunpack.c.l.b16 %v487
        %v603 = vunpack.c.h.b16 %v487
        %v604 = vunpack.c.l.b16 %v488
        %v605 = vunpack.c.h.b16 %v488
        %v606 = vunpack.c.l.b16 %v489
        %v607 = vunpack.c.h.b16 %v489
        %v608 = vunpack.c.l.b16 %v490
        %v609 = vunpack.c.h.b16 %v490
        %v610 = vunpack.c.l.b16 %v491
        %v611 = vunpack.c.h.b16 %v491
        %v612 = vunpack.c.l.b16 %v492
        %v613 = vunpack.c.h.b16 %v492
        %v614 = vunpack.c.l.b16 %v493
        %v615 = vunpack.c.h.b16 %v493
        %v616 = vunpack.c.l.b16 %v494
        %v617 = vunpack.c.h.b16 %v494
        %v618 = vunpack.c.l.b16 %v495
        %v619 = vunpack.c.h.b16 %v495
        %v620 = vunpack.c.l.b16 %v496
        %v621 = vunpack.c.h.b16 %v496
        %v622 = vunpack.c.l.b16 %v497
        %v623 = vunpack.c.h.b16 %v497
        %v624 = vunpack.c.l.b16 %v498
        %v625 = vunpack.c.h.b16 %v498
        %v626 = vunpack.c.l.b16 %v499
        %v627 = vunpack.c.h.b16 %v499
        %v628 = vpack.c.b16 %v566, %v564
        %v629 = vpack.c.b16 %v567, %v565
        %v630 = vpack.c.b16 %v570, %v568
        %v631 = vpack.c.b16 %v571, %v569
        %v632 = vpack.c.b16 %v574, %v572
        %v633 = vpack.c.b16 %v575, %v573
        %v634 = vpack.c.b16 %v578, %v576
        %v635 = vpack.c.b16 %v579, %v577
        %v636 = vpack.c.b16 %v582, %v580
        %v637 = vpack.c.b16 %v583, %v581
        %v638 = vpack.c.b16 %v586, %v584
        %v639 = vpack.c.b16 %v587, %v585
        %v640 = vpack.c.b16 %v590, %v588
        %v641 = vpack.c.b16 %v591, %v589
        %v642 = vpack.c.b16 %v594, %v592
        %v643 = vpack.c.b16 %v595, %v593
        %v644 = vpack.c.b16 %v598, %v596
        %v645 = vpack.c.b16 %v599, %v597
        %v646 = vpack.c.b16 %v602, %v600
        %v647 = vpack.c.b16 %v603, %v601
        %v648 = vpack.c.b16 %v606, %v604
        %v649 = vpack.c.b16 %v607, %v605
        %v650 = vpack.c.b16 %v610, %v608
        %v651 = vpack.c.b16 %v611, %v609
        %v652 = vpack.c.b16 %v614, %v612
        %v653 = vpack.c.b16 %v615, %v613
        %v654 = vpack.c.b16 %v618, %v616
        %v655 = vpack.c.b16 %v619, %v617
        %v656 = vpack.c.b16 %v622, %v620
        %v657 = vpack.c.b16 %v623, %v621
        %v658 = vpack.c.b16 %v626, %v624
        %v659 = vpack.c.b16 %v627, %v625
        %v724 = vunpack.c.l.b16 %v500
        %v725 = vunpack.c.l.b16 %v501
        %v726 = vunpack.c.l.b16 %v502
        %v727 = vunpack.c.l.b16 %v503
        %v728 = vunpack.c.l.b16 %v504
        %v729 = vunpack.c.l.b16 %v505
        %v730 = vunpack.c.l.b16 %v506
        %v731 = vunpack.c.l.b16 %v507
        %v732 = vunpack.c.l.b16 %v508
        %v733 = vunpack.c.l.b16 %v509
        %v734 = vunpack.c.l.b16 %v510
        %v735 = vunpack.c.l.b16 %v511
        %v736 = vunpack.c.l.b16 %v512
        %v737 = vunpack.c.l.b16 %v513
        %v738 = vunpack.c.l.b16 %v514
        %v739 = vunpack.c.l.b16 %v515
        %v740 = vunpack.c.l.b16 %v516
        %v741 = vunpack.c.l.b16 %v517
        %v742 = vunpack.c.l.b16 %v518
        %v743 = vunpack.c.l.b16 %v519
        %v744 = vunpack.c.l.b16 %v520
        %v745 = vunpack.c.l.b16 %v521
        %v746 = vunpack.c.l.b16 %v522
        %v747 = vunpack.c.l.b16 %v523
        %v748 = vunpack.c.l.b16 %v524
        %v749 = vunpack.c.l.b16 %v525
        %v750 = vunpack.c.l.b16 %v526
        %v751 = vunpack.c.l.b16 %v527
        %v752 = vunpack.c.l.b16 %v528
        %v753 = vunpack.c.l.b16 %v529
        %v754 = vunpack.c.l.b16 %v530
        %v755 = vunpack.c.l.b16 %v531
        %v756 = vpack.c.b16 %v725, %v724
        %v757 = vpack.c.b16 %v727, %v726
        %v758 = vpack.c.b16 %v729, %v728
        %v759 = vpack.c.b16 %v731, %v730
        %v760 = vpack.c.b16 %v733, %v732
        %v761 = vpack.c.b16 %v735, %v734
        %v762 = vpack.c.b16 %v737, %v736
        %v763 = vpack.c.b16 %v739, %v738
        %v764 = vpack.c.b16 %v741, %v740
        %v765 = vpack.c.b16 %v743, %v742
        %v766 = vpack.c.b16 %v745, %v744
        %v767 = vpack.c.b16 %v747, %v746
        %v768 = vpack.c.b16 %v749, %v748
        %v769 = vpack.c.b16 %v751, %v750
        %v770 = vpack.c.b16 %v753, %v752
        %v771 = vpack.c.b16 %v755, %v754
        %788 = vmatprep.subr.bf16.mxu0 0
        %789 = vmatpush1.bf16.msra.mxu0 %v756
        %790 = vmatprep.subr.bf16.mxu0 0
        %791 = vmatpush1.bf16.msra.mxu0 %v757
        %792 = vmatprep.subr.bf16.mxu0 0
        %793 = vmatpush1.bf16.msra.mxu0 %v758
        %794 = vmatprep.subr.bf16.mxu0 0
        %795 = vmatpush1.bf16.msra.mxu0 %v759
        %796 = vmatprep.subr.bf16.mxu0 0
        %797 = vmatpush1.bf16.msra.mxu0 %v760
        %798 = vmatprep.subr.bf16.mxu0 0
        %799 = vmatpush1.bf16.msra.mxu0 %v761
        %800 = vmatprep.subr.bf16.mxu0 0
        %801 = vmatpush1.bf16.msra.mxu0 %v762
        %802 = vmatprep.subr.bf16.mxu0 0
        %803 = vmatpush1.bf16.msra.mxu0 %v763
        %804 = vmatprep.subr.bf16.mxu0 0
        %805 = vmatpush1.bf16.msra.mxu0 %v764
        %806 = vmatprep.subr.bf16.mxu0 0
        %807 = vmatpush1.bf16.msra.mxu0 %v765
        %808 = vmatprep.subr.bf16.mxu0 0
        %809 = vmatpush1.bf16.msra.mxu0 %v766
        %810 = vmatprep.subr.bf16.mxu0 0
        %811 = vmatpush1.bf16.msra.mxu0 %v767
        %812 = vmatprep.subr.bf16.mxu0 0
        %813 = vmatpush1.bf16.msra.mxu0 %v768
        %814 = vmatprep.subr.bf16.mxu0 0
        %815 = vmatpush1.bf16.msra.mxu0 %v769
        %816 = vmatprep.subr.bf16.mxu0 0
        %817 = vmatpush1.bf16.msra.mxu0 %v770
        %818 = vmatprep.subr.bf16.mxu0 0
        %819 = vmatpush1.bf16.msra.mxu0 %v771
        %820 = vmatprep.mubr.bf16.mxu0 %v629
        %821 = vmatmul.mubr.bf16.gmra.mrb[0].mxu0 %v628
        %v822 = vpop.f32.mrb[0].mxu0
        %v823 = vadd.f32 0.0, %v822
        %v824 = vpop.f32.mrb[0].mxu0
        %v825 = vpop.f32.mrb[0].mxu0
        %v826 = vadd.f32 0.0, %v825
        %v827 = vpop.f32.mrb[0].mxu0
        %828 = vmatprep.mubr.bf16.mxu0 %v631
        %829 = vmatmul.mubr.bf16.gmra.mrb[0].mxu0 %v630
        %v830 = vpop.f32.mrb[0].mxu0
        %v831 = vadd.f32 0.0, %v830
        %v832 = vpop.f32.mrb[0].mxu0
        %v833 = vpop.f32.mrb[0].mxu0
        %v834 = vadd.f32 0.0, %v833
        %v835 = vpop.f32.mrb[0].mxu0
        %836 = vmatprep.mubr.bf16.mxu0 %v633
        %837 = vmatmul.mubr.bf16.gmra.mrb[0].mxu0 %v632
        %v838 = vpop.f32.mrb[0].mxu0
        %v839 = vadd.f32 0.0, %v838
        %v840 = vpop.f32.mrb[0].mxu0
        %v841 = vpop.f32.mrb[0].mxu0
        %v842 = vadd.f32 0.0, %v841
        %v843 = vpop.f32.mrb[0].mxu0
        %844 = vmatprep.mubr.bf16.mxu0 %v635
        %845 = vmatmul.mubr.bf16.gmra.mrb[0].mxu0 %v634
        %v846 = vpop.f32.mrb[0].mxu0
        %v847 = vadd.f32 0.0, %v846
        %v848 = vpop.f32.mrb[0].mxu0
        %v849 = vpop.f32.mrb[0].mxu0
        %v850 = vadd.f32 0.0, %v849
        %v851 = vpop.f32.mrb[0].mxu0
        %852 = vmatprep.mubr.bf16.mxu0 %v637
        %853 = vmatmul.mubr.bf16.gmra.mrb[0].mxu0 %v636
        %v854 = vpop.f32.mrb[0].mxu0
        %v855 = vadd.f32 0.0, %v854
        %v856 = vpop.f32.mrb[0].mxu0
        %v857 = vpop.f32.mrb[0].mxu0
        %v858 = vadd.f32 0.0, %v857
        %v859 = vpop.f32.mrb[0].mxu0
        %860 = vmatprep.mubr.bf16.mxu0 %v639
        %861 = vmatmul.mubr.bf16.gmra.mrb[0].mxu0 %v638
        %v862 = vpop.f32.mrb[0].mxu0
        %v863 = vadd.f32 0.0, %v862
        %v864 = vpop.f32.mrb[0].mxu0
        %v865 = vpop.f32.mrb[0].mxu0
        %v866 = vadd.f32 0.0, %v865
        %v867 = vpop.f32.mrb[0].mxu0
        %868 = vmatprep.mubr.bf16.mxu0 %v641
        %869 = vmatmul.mubr.bf16.gmra.mrb[0].mxu0 %v640
        %v870 = vpop.f32.mrb[0].mxu0
        %v871 = vadd.f32 0.0, %v870
        %v872 = vpop.f32.mrb[0].mxu0
        %v873 = vpop.f32.mrb[0].mxu0
        %v874 = vadd.f32 0.0, %v873
        %v875 = vpop.f32.mrb[0].mxu0
        %876 = vmatprep.mubr.bf16.mxu0 %v643
        %877 = vmatmul.mubr.bf16.gmra.mrb[0].mxu0 %v642
        %v878 = vpop.f32.mrb[0].mxu0
        %v879 = vadd.f32 0.0, %v878
        %v880 = vpop.f32.mrb[0].mxu0
        %v881 = vpop.f32.mrb[0].mxu0
        %v882 = vadd.f32 0.0, %v881
        %v883 = vpop.f32.mrb[0].mxu0
        %884 = vmatprep.mubr.bf16.mxu0 %v645
        %885 = vmatmul.mubr.bf16.gmra.mrb[0].mxu0 %v644
        %v886 = vpop.f32.mrb[0].mxu0
        %v887 = vadd.f32 0.0, %v886
        %v888 = vpop.f32.mrb[0].mxu0
        %v889 = vpop.f32.mrb[0].mxu0
        %v890 = vadd.f32 0.0, %v889
        %v891 = vpop.f32.mrb[0].mxu0
        %892 = vmatprep.mubr.bf16.mxu0 %v647
        %893 = vmatmul.mubr.bf16.gmra.mrb[0].mxu0 %v646
        %v894 = vpop.f32.mrb[0].mxu0
        %v895 = vadd.f32 0.0, %v894
        %v896 = vpop.f32.mrb[0].mxu0
        %v897 = vpop.f32.mrb[0].mxu0
        %v898 = vadd.f32 0.0, %v897
        %v899 = vpop.f32.mrb[0].mxu0
        %900 = vmatprep.mubr.bf16.mxu0 %v649
        %901 = vmatmul.mubr.bf16.gmra.mrb[0].mxu0 %v648
        %v902 = vpop.f32.mrb[0].mxu0
        %v903 = vadd.f32 0.0, %v902
        %v904 = vpop.f32.mrb[0].mxu0
        %v905 = vpop.f32.mrb[0].mxu0
        %v906 = vadd.f32 0.0, %v905
        %v907 = vpop.f32.mrb[0].mxu0
        %908 = vmatprep.mubr.bf16.mxu0 %v651
        %909 = vmatmul.mubr.bf16.gmra.mrb[0].mxu0 %v650
        %v910 = vpop.f32.mrb[0].mxu0
        %v911 = vadd.f32 0.0, %v910
        %v912 = vpop.f32.mrb[0].mxu0
        %v913 = vpop.f32.mrb[0].mxu0
        %v914 = vadd.f32 0.0, %v913
        %v915 = vpop.f32.mrb[0].mxu0
        %916 = vmatprep.mubr.bf16.mxu0 %v653
        %917 = vmatmul.mubr.bf16.gmra.mrb[0].mxu0 %v652
        %v918 = vpop.f32.mrb[0].mxu0
        %v919 = vadd.f32 0.0, %v918
        %v920 = vpop.f32.mrb[0].mxu0
        %v921 = vpop.f32.mrb[0].mxu0
        %v922 = vadd.f32 0.0, %v921
        %v923 = vpop.f32.mrb[0].mxu0
        %924 = vmatprep.mubr.bf16.mxu0 %v655
        %925 = vmatmul.mubr.bf16.gmra.mrb[0].mxu0 %v654
        %v926 = vpop.f32.mrb[0].mxu0
        %v927 = vadd.f32 0.0, %v926
        %v928 = vpop.f32.mrb[0].mxu0
        %v929 = vpop.f32.mrb[0].mxu0
        %v930 = vadd.f32 0.0, %v929
        %v931 = vpop.f32.mrb[0].mxu0
        %932 = vmatprep.mubr.bf16.mxu0 %v657
        %933 = vmatmul.mubr.bf16.gmra.mrb[0].mxu0 %v656
        %v934 = vpop.f32.mrb[0].mxu0
        %v935 = vadd.f32 0.0, %v934
        %v936 = vpop.f32.mrb[0].mxu0
        %v937 = vpop.f32.mrb[0].mxu0
        %v938 = vadd.f32 0.0, %v937
        %v939 = vpop.f32.mrb[0].mxu0
        %940 = vmatprep.mubr.bf16.mxu0 %v659
        %941 = vmatmul.mubr.bf16.gmra.mrb[0].mxu0 %v658
        %v942 = vpop.f32.mrb[0].mxu0
        %v943 = vadd.f32 0.0, %v942
        %v944 = vpop.f32.mrb[0].mxu0
        %v945 = vpop.f32.mrb[0].mxu0
        %v946 = vadd.f32 0.0, %v945
        %v947 = vpop.f32.mrb[0].mxu0
        %948 = vdwg.mxu0
        %v949 = vadd.f32 %v436, %v823
        %v950 = vadd.f32 %v437, %v826
        %v951 = vadd.f32 %v438, %v831
        %v952 = vadd.f32 %v439, %v834
        %v953 = vadd.f32 %v440, %v839
        %v954 = vadd.f32 %v441, %v842
        %v955 = vadd.f32 %v442, %v847
        %v956 = vadd.f32 %v443, %v850
        %v957 = vadd.f32 %v444, %v855
        %v958 = vadd.f32 %v445, %v858
        %v959 = vadd.f32 %v446, %v863
        %v960 = vadd.f32 %v447, %v866
        %v961 = vadd.f32 %v448, %v871
        %v962 = vadd.f32 %v449, %v874
        %v963 = vadd.f32 %v450, %v879
        %v964 = vadd.f32 %v451, %v882
        %v965 = vadd.f32 %v452, %v887
        %v966 = vadd.f32 %v453, %v890
        %v967 = vadd.f32 %v454, %v895
        %v968 = vadd.f32 %v455, %v898
        %v969 = vadd.f32 %v456, %v903
        %v970 = vadd.f32 %v457, %v906
        %v971 = vadd.f32 %v458, %v911
        %v972 = vadd.f32 %v459, %v914
        %v973 = vadd.f32 %v460, %v919
        %v974 = vadd.f32 %v461, %v922
        %v975 = vadd.f32 %v462, %v927
        %v976 = vadd.f32 %v463, %v930
        %v977 = vadd.f32 %v464, %v935
        %v978 = vadd.f32 %v465, %v938
        %v979 = vadd.f32 %v466, %v943
        %v980 = vadd.f32 %v467, %v946
        %981 = vst [vmem:[#allocation2] sm:$0xff] %v949
        %982 = vst [vmem:[#allocation2 + $0x8] sm:$0xff] %v950
        %983 = vst [vmem:[#allocation2 + $0x10] sm:$0xff] %v951
        %984 = vst [vmem:[#allocation2 + $0x18] sm:$0xff] %v952
        %985 = vst [vmem:[#allocation2 + $0x20] sm:$0xff] %v953
        %986 = vst [vmem:[#allocation2 + $0x28] sm:$0xff] %v954
        %987 = vst [vmem:[#allocation2 + $0x30] sm:$0xff] %v955
        %988 = vst [vmem:[#allocation2 + $0x38] sm:$0xff] %v956
        %989 = vst [vmem:[#allocation2 + $0x40] sm:$0xff] %v957
        %990 = vst [vmem:[#allocation2 + $0x48] sm:$0xff] %v958
        %991 = vst [vmem:[#allocation2 + $0x50] sm:$0xff] %v959
        %992 = vst [vmem:[#allocation2 + $0x58] sm:$0xff] %v960
        %993 = vst [vmem:[#allocation2 + $0x60] sm:$0xff] %v961
        %994 = vst [vmem:[#allocation2 + $0x68] sm:$0xff] %v962
        %995 = vst [vmem:[#allocation2 + $0x70] sm:$0xff] %v963
        %996 = vst [vmem:[#allocation2 + $0x78] sm:$0xff] %v964
        %997 = vst [vmem:[#allocation2 + $0x80] sm:$0xff] %v965
        %998 = vst [vmem:[#allocation2 + $0x88] sm:$0xff] %v966
        %999 = vst [vmem:[#allocation2 + $0x90] sm:$0xff] %v967
        %1000 = vst [vmem:[#allocation2 + $0x98] sm:$0xff] %v968
        %1001 = vst [vmem:[#allocation2 + $0xa0] sm:$0xff] %v969
        %1002 = vst [vmem:[#allocation2 + $0xa8] sm:$0xff] %v970
        %1003 = vst [vmem:[#allocation2 + $0xb0] sm:$0xff] %v971
        %1004 = vst [vmem:[#allocation2 + $0xb8] sm:$0xff] %v972
        %1005 = vst [vmem:[#allocation2 + $0xc0] sm:$0xff] %v973
        %1006 = vst [vmem:[#allocation2 + $0xc8] sm:$0xff] %v974
        %1007 = vst [vmem:[#allocation2 + $0xd0] sm:$0xff] %v975
        %1008 = vst [vmem:[#allocation2 + $0xd8] sm:$0xff] %v976
        %1009 = vst [vmem:[#allocation2 + $0xe0] sm:$0xff] %v977
        %1010 = vst [vmem:[#allocation2 + $0xe8] sm:$0xff] %v978
        %1011 = vst [vmem:[#allocation2 + $0xf0] sm:$0xff] %v979
        %1012 = vst [vmem:[#allocation2 + $0xf8] sm:$0xff] %v980
        %p1013 = scmp.eq.s32.totalorder %s20, 1
        // Predicated region
        $region79: #{gnn_forward.3} parent=69 // pred_check
          %p1014 = pneg %p1013
        $region80: #{gnn_forward.3} parent=69 // pred_check_branch
          %1016 = sbr.rel (%p1014) target = $region82
        $region81: #{gnn_forward.3} parent=69 // pred_region
          %v1017 = vld [vmem:[#allocation2] sm:$0xff]
          %v1018 = vld [vmem:[#allocation2 + $0x8] sm:$0xff]
          %v1019 = vld [vmem:[#allocation2 + $0x10] sm:$0xff]
          %v1020 = vld [vmem:[#allocation2 + $0x18] sm:$0xff]
          %v1021 = vld [vmem:[#allocation2 + $0x20] sm:$0xff]
          %v1022 = vld [vmem:[#allocation2 + $0x28] sm:$0xff]
          %v1023 = vld [vmem:[#allocation2 + $0x30] sm:$0xff]
          %v1024 = vld [vmem:[#allocation2 + $0x38] sm:$0xff]
          %v1025 = vld [vmem:[#allocation2 + $0x40] sm:$0xff]
          %v1026 = vld [vmem:[#allocation2 + $0x48] sm:$0xff]
          %v1027 = vld [vmem:[#allocation2 + $0x50] sm:$0xff]
          %v1028 = vld [vmem:[#allocation2 + $0x58] sm:$0xff]
          %v1029 = vld [vmem:[#allocation2 + $0x60] sm:$0xff]
          %v1030 = vld [vmem:[#allocation2 + $0x68] sm:$0xff]
          %v1031 = vld [vmem:[#allocation2 + $0x70] sm:$0xff]
          %v1032 = vld [vmem:[#allocation2 + $0x78] sm:$0xff]
          %v1033 = vld [vmem:[#allocation2 + $0x80] sm:$0xff]
          %v1034 = vld [vmem:[#allocation2 + $0x88] sm:$0xff]
          %v1035 = vld [vmem:[#allocation2 + $0x90] sm:$0xff]
          %v1036 = vld [vmem:[#allocation2 + $0x98] sm:$0xff]
          %v1037 = vld [vmem:[#allocation2 + $0xa0] sm:$0xff]
          %v1038 = vld [vmem:[#allocation2 + $0xa8] sm:$0xff]
          %v1039 = vld [vmem:[#allocation2 + $0xb0] sm:$0xff]
          %v1040 = vld [vmem:[#allocation2 + $0xb8] sm:$0xff]
          %v1041 = vld [vmem:[#allocation2 + $0xc0] sm:$0xff]
          %v1042 = vld [vmem:[#allocation2 + $0xc8] sm:$0xff]
          %v1043 = vld [vmem:[#allocation2 + $0xd0] sm:$0xff]
          %v1044 = vld [vmem:[#allocation2 + $0xd8] sm:$0xff]
          %v1045 = vld [vmem:[#allocation2 + $0xe0] sm:$0xff]
          %v1046 = vld [vmem:[#allocation2 + $0xe8] sm:$0xff]
          %v1047 = vld [vmem:[#allocation2 + $0xf0] sm:$0xff]
          %v1048 = vld [vmem:[#allocation2 + $0xf8] sm:$0xff]
          %v1049 = vpack.c.bf16 %v1018, %v1017
          %v1050 = vpack.c.bf16 %v1020, %v1019
          %v1051 = vpack.c.bf16 %v1022, %v1021
          %v1052 = vpack.c.bf16 %v1024, %v1023
          %v1053 = vpack.c.bf16 %v1026, %v1025
          %v1054 = vpack.c.bf16 %v1028, %v1027
          %v1055 = vpack.c.bf16 %v1030, %v1029
          %v1056 = vpack.c.bf16 %v1032, %v1031
          %v1057 = vpack.c.bf16 %v1034, %v1033
          %v1058 = vpack.c.bf16 %v1036, %v1035
          %v1059 = vpack.c.bf16 %v1038, %v1037
          %v1060 = vpack.c.bf16 %v1040, %v1039
          %v1061 = vpack.c.bf16 %v1042, %v1041
          %v1062 = vpack.c.bf16 %v1044, %v1043
          %v1063 = vpack.c.bf16 %v1046, %v1045
          %v1064 = vpack.c.bf16 %v1048, %v1047
          %v1065 = vld [vmem:[%s2] sm:$0xf]
          %v1066 = vld [vmem:[%s2 + $0x4] sm:$0xf]
          %v1067 = vld [vmem:[%s2 + $0x8] sm:$0xf]
          %v1068 = vld [vmem:[%s2 + $0xc] sm:$0xf]
          %v1069 = vld [vmem:[%s2 + $0x10] sm:$0xf]
          %v1070 = vld [vmem:[%s2 + $0x14] sm:$0xf]
          %v1071 = vld [vmem:[%s2 + $0x18] sm:$0xf]
          %v1072 = vld [vmem:[%s2 + $0x1c] sm:$0xf]
          %v1073 = vld [vmem:[%s2 + $0x20] sm:$0xf]
          %v1074 = vld [vmem:[%s2 + $0x24] sm:$0xf]
          %v1075 = vld [vmem:[%s2 + $0x28] sm:$0xf]
          %v1076 = vld [vmem:[%s2 + $0x2c] sm:$0xf]
          %v1077 = vld [vmem:[%s2 + $0x30] sm:$0xf]
          %v1078 = vld [vmem:[%s2 + $0x34] sm:$0xf]
          %v1079 = vld [vmem:[%s2 + $0x38] sm:$0xf]
          %v1080 = vld [vmem:[%s2 + $0x3c] sm:$0xf]
          %v1081 = vld [vmem:[%s3] sm:$0x1]
          %v1083 = vlaneseq
          %v1084 = vshrl.u32 %v1083, 7
          %v1085 = vsub.s32 0, %v1084
          %v1086 = vrot.slane %v1081, %v1085
          %v1104 = vunpack.c.l.b16 %v1065
          %v1105 = vunpack.c.l.b16 %v1066
          %v1106 = vunpack.c.l.b16 %v1067
          %v1107 = vunpack.c.l.b16 %v1068
          %v1108 = vunpack.c.l.b16 %v1069
          %v1109 = vunpack.c.l.b16 %v1070
          %v1110 = vunpack.c.l.b16 %v1071
          %v1111 = vunpack.c.l.b16 %v1072
          %v1112 = vunpack.c.l.b16 %v1073
          %v1113 = vunpack.c.l.b16 %v1074
          %v1114 = vunpack.c.l.b16 %v1075
          %v1115 = vunpack.c.l.b16 %v1076
          %v1116 = vunpack.c.l.b16 %v1077
          %v1117 = vunpack.c.l.b16 %v1078
          %v1118 = vunpack.c.l.b16 %v1079
          %v1119 = vunpack.c.l.b16 %v1080
          %v1120 = vpack.c.b16 %v1105, %v1104
          %v1121 = vpack.c.b16 %v1107, %v1106
          %v1122 = vpack.c.b16 %v1109, %v1108
          %v1123 = vpack.c.b16 %v1111, %v1110
          %v1124 = vpack.c.b16 %v1113, %v1112
          %v1125 = vpack.c.b16 %v1115, %v1114
          %v1126 = vpack.c.b16 %v1117, %v1116
          %v1127 = vpack.c.b16 %v1119, %v1118
          %1136 = vmatprep.subr.bf16.mxu0 0
          %1137 = vmatpush1.bf16.msra.mxu0 %v1120
          %1138 = vmatprep.subr.bf16.mxu0 0
          %1139 = vmatpush1.bf16.msra.mxu0 %v1121
          %1140 = vmatprep.subr.bf16.mxu0 0
          %1141 = vmatpush1.bf16.msra.mxu0 %v1122
          %1142 = vmatprep.subr.bf16.mxu0 0
          %1143 = vmatpush1.bf16.msra.mxu0 %v1123
          %1144 = vmatprep.subr.bf16.mxu0 0
          %1145 = vmatpush1.bf16.msra.mxu0 %v1124
          %1146 = vmatprep.subr.bf16.mxu0 0
          %1147 = vmatpush1.bf16.msra.mxu0 %v1125
          %1148 = vmatprep.subr.bf16.mxu0 0
          %1149 = vmatpush1.bf16.msra.mxu0 %v1126
          %1150 = vmatprep.subr.bf16.mxu0 0
          %1151 = vmatpush1.bf16.msra.mxu0 %v1127
          %1152 = vmatprep.subr.bf16.mxu0 0
          %1153 = vmatpush1.bf16.msra.mxu0 0
          %1154 = vmatprep.subr.bf16.mxu0 0
          %1155 = vmatpush1.bf16.msra.mxu0 0
          %1156 = vmatprep.subr.bf16.mxu0 0
          %1157 = vmatpush1.bf16.msra.mxu0 0
          %1158 = vmatprep.subr.bf16.mxu0 0
          %1159 = vmatpush1.bf16.msra.mxu0 0
          %1160 = vmatprep.subr.bf16.mxu0 0
          %1161 = vmatpush1.bf16.msra.mxu0 0
          %1162 = vmatprep.subr.bf16.mxu0 0
          %1163 = vmatpush1.bf16.msra.mxu0 0
          %1164 = vmatprep.subr.bf16.mxu0 0
          %1165 = vmatpush1.bf16.msra.mxu0 0
          %1166 = vmatprep.subr.bf16.mxu0 0
          %1167 = vmatpush1.bf16.msra.mxu0 0
          %1168 = vmatprep.mubr.bf16.mxu0 0
          %1169 = vmatmul.mubr.bf16.gmra.mrb[0].mxu0 %v1049
          %v1170 = vpop.f32.mrb[0].mxu0
          %v1171 = vadd.f32 %v1086, %v1170
          %v1172 = vpop.f32.mrb[0].mxu0
          %v1173 = vpop.f32.mrb[0].mxu0
          %v1174 = vadd.f32 %v1086, %v1173
          %v1175 = vpop.f32.mrb[0].mxu0
          %1176 = vmatprep.mubr.bf16.mxu0 0
          %1177 = vmatmul.mubr.bf16.gmra.mrb[0].mxu0 %v1050
          %v1178 = vpop.f32.mrb[0].mxu0
          %v1179 = vadd.f32 %v1086, %v1178
          %v1180 = vpop.f32.mrb[0].mxu0
          %v1181 = vpop.f32.mrb[0].mxu0
          %v1182 = vadd.f32 %v1086, %v1181
          %v1183 = vpop.f32.mrb[0].mxu0
          %1184 = vmatprep.mubr.bf16.mxu0 0
          %1185 = vmatmul.mubr.bf16.gmra.mrb[0].mxu0 %v1051
          %v1186 = vpop.f32.mrb[0].mxu0
          %v1187 = vadd.f32 %v1086, %v1186
          %v1188 = vpop.f32.mrb[0].mxu0
          %v1189 = vpop.f32.mrb[0].mxu0
          %v1190 = vadd.f32 %v1086, %v1189
          %v1191 = vpop.f32.mrb[0].mxu0
          %1192 = vmatprep.mubr.bf16.mxu0 0
          %1193 = vmatmul.mubr.bf16.gmra.mrb[0].mxu0 %v1052
          %v1194 = vpop.f32.mrb[0].mxu0
          %v1195 = vadd.f32 %v1086, %v1194
          %v1196 = vpop.f32.mrb[0].mxu0
          %v1197 = vpop.f32.mrb[0].mxu0
          %v1198 = vadd.f32 %v1086, %v1197
          %v1199 = vpop.f32.mrb[0].mxu0
          %1200 = vmatprep.mubr.bf16.mxu0 0
          %1201 = vmatmul.mubr.bf16.gmra.mrb[0].mxu0 %v1053
          %v1202 = vpop.f32.mrb[0].mxu0
          %v1203 = vadd.f32 %v1086, %v1202
          %v1204 = vpop.f32.mrb[0].mxu0
          %v1205 = vpop.f32.mrb[0].mxu0
          %v1206 = vadd.f32 %v1086, %v1205
          %v1207 = vpop.f32.mrb[0].mxu0
          %1208 = vmatprep.mubr.bf16.mxu0 0
          %1209 = vmatmul.mubr.bf16.gmra.mrb[0].mxu0 %v1054
          %v1210 = vpop.f32.mrb[0].mxu0
          %v1211 = vadd.f32 %v1086, %v1210
          %v1212 = vpop.f32.mrb[0].mxu0
          %v1213 = vpop.f32.mrb[0].mxu0
          %v1214 = vadd.f32 %v1086, %v1213
          %v1215 = vpop.f32.mrb[0].mxu0
          %1216 = vmatprep.mubr.bf16.mxu0 0
          %1217 = vmatmul.mubr.bf16.gmra.mrb[0].mxu0 %v1055
          %v1218 = vpop.f32.mrb[0].mxu0
          %v1219 = vadd.f32 %v1086, %v1218
          %v1220 = vpop.f32.mrb[0].mxu0
          %v1221 = vpop.f32.mrb[0].mxu0
          %v1222 = vadd.f32 %v1086, %v1221
          %v1223 = vpop.f32.mrb[0].mxu0
          %1224 = vmatprep.mubr.bf16.mxu0 0
          %1225 = vmatmul.mubr.bf16.gmra.mrb[0].mxu0 %v1056
          %v1226 = vpop.f32.mrb[0].mxu0
          %v1227 = vadd.f32 %v1086, %v1226
          %v1228 = vpop.f32.mrb[0].mxu0
          %v1229 = vpop.f32.mrb[0].mxu0
          %v1230 = vadd.f32 %v1086, %v1229
          %v1231 = vpop.f32.mrb[0].mxu0
          %1232 = vmatprep.mubr.bf16.mxu0 0
          %1233 = vmatmul.mubr.bf16.gmra.mrb[0].mxu0 %v1057
          %v1234 = vpop.f32.mrb[0].mxu0
          %v1235 = vadd.f32 %v1086, %v1234
          %v1236 = vpop.f32.mrb[0].mxu0
          %v1237 = vpop.f32.mrb[0].mxu0
          %v1238 = vadd.f32 %v1086, %v1237
          %v1239 = vpop.f32.mrb[0].mxu0
          %1240 = vmatprep.mubr.bf16.mxu0 0
          %1241 = vmatmul.mubr.bf16.gmra.mrb[0].mxu0 %v1058
          %v1242 = vpop.f32.mrb[0].mxu0
          %v1243 = vadd.f32 %v1086, %v1242
          %v1244 = vpop.f32.mrb[0].mxu0
          %v1245 = vpop.f32.mrb[0].mxu0
          %v1246 = vadd.f32 %v1086, %v1245
          %v1247 = vpop.f32.mrb[0].mxu0
          %1248 = vmatprep.mubr.bf16.mxu0 0
          %1249 = vmatmul.mubr.bf16.gmra.mrb[0].mxu0 %v1059
          %v1250 = vpop.f32.mrb[0].mxu0
          %v1251 = vadd.f32 %v1086, %v1250
          %v1252 = vpop.f32.mrb[0].mxu0
          %v1253 = vpop.f32.mrb[0].mxu0
          %v1254 = vadd.f32 %v1086, %v1253
          %v1255 = vpop.f32.mrb[0].mxu0
          %1256 = vmatprep.mubr.bf16.mxu0 0
          %1257 = vmatmul.mubr.bf16.gmra.mrb[0].mxu0 %v1060
          %v1258 = vpop.f32.mrb[0].mxu0
          %v1259 = vadd.f32 %v1086, %v1258
          %v1260 = vpop.f32.mrb[0].mxu0
          %v1261 = vpop.f32.mrb[0].mxu0
          %v1262 = vadd.f32 %v1086, %v1261
          %v1263 = vpop.f32.mrb[0].mxu0
          %1264 = vmatprep.mubr.bf16.mxu0 0
          %1265 = vmatmul.mubr.bf16.gmra.mrb[0].mxu0 %v1061
          %v1266 = vpop.f32.mrb[0].mxu0
          %v1267 = vadd.f32 %v1086, %v1266
          %v1268 = vpop.f32.mrb[0].mxu0
          %v1269 = vpop.f32.mrb[0].mxu0
          %v1270 = vadd.f32 %v1086, %v1269
          %v1271 = vpop.f32.mrb[0].mxu0
          %1272 = vmatprep.mubr.bf16.mxu0 0
          %1273 = vmatmul.mubr.bf16.gmra.mrb[0].mxu0 %v1062
          %v1274 = vpop.f32.mrb[0].mxu0
          %v1275 = vadd.f32 %v1086, %v1274
          %v1276 = vpop.f32.mrb[0].mxu0
          %v1277 = vpop.f32.mrb[0].mxu0
          %v1278 = vadd.f32 %v1086, %v1277
          %v1279 = vpop.f32.mrb[0].mxu0
          %1280 = vmatprep.mubr.bf16.mxu0 0
          %1281 = vmatmul.mubr.bf16.gmra.mrb[0].mxu0 %v1063
          %v1282 = vpop.f32.mrb[0].mxu0
          %v1283 = vadd.f32 %v1086, %v1282
          %v1284 = vpop.f32.mrb[0].mxu0
          %v1285 = vpop.f32.mrb[0].mxu0
          %v1286 = vadd.f32 %v1086, %v1285
          %v1287 = vpop.f32.mrb[0].mxu0
          %1288 = vmatprep.mubr.bf16.mxu0 0
          %1289 = vmatmul.mubr.bf16.gmra.mrb[0].mxu0 %v1064
          %v1290 = vpop.f32.mrb[0].mxu0
          %v1291 = vadd.f32 %v1086, %v1290
          %v1292 = vpop.f32.mrb[0].mxu0
          %v1293 = vpop.f32.mrb[0].mxu0
          %v1294 = vadd.f32 %v1086, %v1293
          %v1295 = vpop.f32.mrb[0].mxu0
          %1296 = vdwg.mxu0
          %1297 = vst [vmem:[%s397] sm:$0xff] %v1171
          %1298 = vst [vmem:[%s397 + $0x8] sm:$0xff] %v1174
          %1299 = vst [vmem:[%s397 + $0x10] sm:$0xff] %v1179
          %1300 = vst [vmem:[%s397 + $0x18] sm:$0xff] %v1182
          %1301 = vst [vmem:[%s397 + $0x20] sm:$0xff] %v1187
          %1302 = vst [vmem:[%s397 + $0x28] sm:$0xff] %v1190
          %1303 = vst [vmem:[%s397 + $0x30] sm:$0xff] %v1195
          %1304 = vst [vmem:[%s397 + $0x38] sm:$0xff] %v1198
          %1305 = vst [vmem:[%s397 + $0x40] sm:$0xff] %v1203
          %1306 = vst [vmem:[%s397 + $0x48] sm:$0xff] %v1206
          %1307 = vst [vmem:[%s397 + $0x50] sm:$0xff] %v1211
          %1308 = vst [vmem:[%s397 + $0x58] sm:$0xff] %v1214
          %1309 = vst [vmem:[%s397 + $0x60] sm:$0xff] %v1219
          %1310 = vst [vmem:[%s397 + $0x68] sm:$0xff] %v1222
          %1311 = vst [vmem:[%s397 + $0x70] sm:$0xff] %v1227
          %1312 = vst [vmem:[%s397 + $0x78] sm:$0xff] %v1230
          %1313 = vst [vmem:[%s397 + $0x80] sm:$0xff] %v1235
          %1314 = vst [vmem:[%s397 + $0x88] sm:$0xff] %v1238
          %1315 = vst [vmem:[%s397 + $0x90] sm:$0xff] %v1243
          %1316 = vst [vmem:[%s397 + $0x98] sm:$0xff] %v1246
          %1317 = vst [vmem:[%s397 + $0xa0] sm:$0xff] %v1251
          %1318 = vst [vmem:[%s397 + $0xa8] sm:$0xff] %v1254
          %1319 = vst [vmem:[%s397 + $0xb0] sm:$0xff] %v1259
          %1320 = vst [vmem:[%s397 + $0xb8] sm:$0xff] %v1262
          %1321 = vst [vmem:[%s397 + $0xc0] sm:$0xff] %v1267
          %1322 = vst [vmem:[%s397 + $0xc8] sm:$0xff] %v1270
          %1323 = vst [vmem:[%s397 + $0xd0] sm:$0xff] %v1275
          %1324 = vst [vmem:[%s397 + $0xd8] sm:$0xff] %v1278
          %1325 = vst [vmem:[%s397 + $0xe0] sm:$0xff] %v1283
          %1326 = vst [vmem:[%s397 + $0xe8] sm:$0xff] %v1286
          %1327 = vst [vmem:[%s397 + $0xf0] sm:$0xff] %v1291
          %1328 = vst [vmem:[%s397 + $0xf8] sm:$0xff] %v1294
        $region82: #{gnn_forward.3} parent=69 // pred_fallthru
          _
        %s1329 = smul.u32 32, %s19
        %p1330 = scmp.lt.s32.totalorder %s1329, 63
        %s1331 = scalar_select %p1330, %s1329, 63
        %s1332 = smul.addr %s1331, 8
        %s1333 = scalar_lea.vmem %s4, %s1332
        // Predicated region
        $region83: #{gnn_forward.3} parent=69 // pred_check
          %p1334 = pneg %p141
        $region84: #{gnn_forward.3} parent=69 // pred_check_branch
          %1336 = sbr.rel (%p1334) target = $region86
        $region85: #{gnn_forward.3} parent=69 // pred_region
          %s1337 = smul.u32 32, %s19
        $region86: #{gnn_forward.3} parent=69 // pred_fallthru
          _
      $region70: #{gnn_forward.3} parent=5 // pred_fallthru
        _
      %p1338 = scmp.le.s32.totalorder 2, %s10
      // Predicated region
      $region87: #{gnn_forward.3} parent=5 // pred_check
        %p1339 = pneg %p1338
      $region88: #{gnn_forward.3} parent=5 // pred_check_branch
        %1341 = sbr.rel (%p1339) target = $region90
      $region89: #{gnn_forward.3} parent=5 // pred_region
        %s1342 = ssub.s32 %s10, 2
        // Predicated region
        $region91: #{gnn_forward.3} parent=89 // pred_check
          %p1343 = pneg %p147
        $region92: #{gnn_forward.3} parent=89 // pred_check_branch
          %1345 = sbr.rel (%p1343) target = $region94
        $region93: #{gnn_forward.3} parent=89 // pred_region
          %s1346 = smul.u32 32, %s21
          %p1347 = scmp.lt.s32.totalorder %s1346, 63
          %s1348 = scalar_select %p1347, %s1346, 63
          %s1349 = smul.addr %s1348, 8
          %s1350 = scalar_lea.vmem %s4, %s1349
        $region94: #{gnn_forward.3} parent=89 // pred_fallthru
          _
      $region90: #{gnn_forward.3} parent=5 // pred_fallthru
        _
    $region6: #{gnn_forward.3} parent=1 // loop_footer
      %s14 = sadd.s32 1, %s10
    $region7: #{gnn_forward.3} parent=1 // loop_footer_branch
      %9 = sbr.rel target = $region3
    $region8: #{gnn_forward.3} parent=1 // loop_exit
      _

// kernel: gnn_forward.2
$region0: #{gnn_forward.2}
  #allocation0 [shape = 'u32[]', space=smem, size = 0x4, offset = 0x4, fixed_abs, tag = 'smem constant byte address 0x4 - core index']
  #allocation1 [shape = 'u32[144,128]{1,0:T(1,128)}', space=vmem, size = 0x12000, scoped, tag = 'internal scratch']
  #allocation2 [shape = 'f32[256,128]{1,0:T(8,128)}', space=vmem, size = 0x20000, scoped, tag = 'scratch operand']
  %s0 = inlined_call_operand.vmem [shape: bf16[512,512], index: 0, kind: input, shape index: {}]
  %s1 = inlined_call_operand.vmem [shape: bf16[512,128], index: 1, kind: input, shape index: {}]
  %s2 = inlined_call_operand.vmem [shape: bf16[128,128], index: 2, kind: input, shape index: {}]
  %s3 = inlined_call_operand.vmem [shape: f32[1,128], index: 3, kind: input, shape index: {}]
  %s4 = inlined_call_operand.vmem [shape: bf16[512,128], index: 4, kind: output, shape index: {}]
  %s5 = sld [smem:[#allocation0]]
  $region95: #{gnn_forward.2} parent=0
    _
  %s7 = ssub.s32 1, %s5
  %s8 = scalar_select 0, %s7, %s5
  $region1: #{gnn_forward.2} parent=0
    #allocation3 [shape = 'u8[262144]{0}', space=vmem, size = 0x40000, scoped, tag = 'input window, operand 0']
    loop: start=0, step=1, limit=6
    $region2: #{gnn_forward.2} parent=1 // loop_pre_header
      _
    $region3: #{gnn_forward.2} parent=1 // loop_header
      %s10 = sphi 0, %s14
      %p11 = scmp.ge.s32.totalorder %s10, 6
      %s17 = sphi 0, %s29
      %s18 = sphi 0, %s25
      %s19 = sphi 0, %s17
      %s20 = sphi 0, %s18
      %s21 = sphi 0, %s19
      %s22 = sphi 0, %s20
      %s34 = sphi 0, %s36
      %s37 = sphi 0, %s34
      %s38 = sphi 0, %s37
      %s54 = sphi 0, %s38
      %s60 = sphi 0, %s62
      %s63 = sphi 0, %s60
      %s64 = sphi 0, %s63
      %s80 = sphi 0, %s64
      %s84 = sphi 0, %s84
      %s86 = sphi 0, %s84
      %s87 = sphi 0, %s86
      %s101 = sphi 0, %s87
      %s105 = sphi 0, %s105
      %s107 = sphi 0, %s105
      %s108 = sphi 0, %s107
      %s122 = sphi 0, %s108
      %s128 = sphi 0, %s130
      %s131 = sphi 0, %s128
      %s132 = sphi 0, %s131
      %s148 = sphi 0, %s132
    $region4: #{gnn_forward.2} parent=1 // loop_header_branch
      %13 = sbr.rel (%p11) target = $region8
    $region5: #{gnn_forward.2} parent=1 // loop_body
      %s15 = ssub.s32 %s10, 1
      %s16 = ssub.s32 %s10, 2
      %s23 = sadd.s32 1, %s18
      %p24 = scmp.ge.s32.totalorder %s23, 2
      %s25 = scalar_select %p24, 0, %s23
      %s26 = sadd.s32 1, %s17
      %s27 = scalar_select %p24, %s26, %s17
      %p28 = scmp.ge.s32.totalorder %s27, 2
      %s29 = scalar_select %p28, 0, %s27
      %s30 = ssub.s32 %s17, %s29
      %s31 = ssub.s32 %s18, %s25
      %s32 = sor.u32 %s30, %s31
      %p33 = scmp.eq.s32.totalorder %s32, 0
      %s35 = sadd.s32 %s34, 1
      %s36 = scalar_select %p33, %s34, %s35
      %p39 = pneg %p33
      %p40 = scmp.eq.s32.totalorder %s10, 3
      %p41 = por %p39, %p40
      %p42 = scmp.ne.s32.totalorder %s34, %s37
      %p43 = scmp.eq.s32.totalorder %s10, 0
      %p44 = por %p42, %p43
      %p45 = scmp.ne.s32.totalorder %s34, %s37
      %p46 = scmp.eq.s32.totalorder %s15, 3
      %p47 = por %p45, %p46
      %p48 = scmp.ne.s32.totalorder %s37, %s38
      %p49 = scmp.eq.s32.totalorder %s15, 0
      %p50 = por %p48, %p49
      %p51 = scmp.ne.s32.totalorder %s37, %s38
      %p52 = scmp.eq.s32.totalorder %s16, 3
      %p53 = por %p51, %p52
      %p55 = scmp.ne.s32.totalorder %s38, %s54
      %p56 = scmp.eq.s32.totalorder %s16, 0
      %p57 = por %p55, %p56
      %s58 = ssub.s32 %s18, %s25
      %p59 = scmp.eq.s32.totalorder %s58, 0
      %s61 = sadd.s32 %s60, 1
      %s62 = scalar_select %p59, %s60, %s61
      %p65 = pneg %p59
      %p66 = scmp.eq.s32.totalorder %s10, 3
      %p67 = por %p65, %p66
      %p68 = scmp.ne.s32.totalorder %s60, %s63
      %p69 = scmp.eq.s32.totalorder %s10, 0
      %p70 = por %p68, %p69
      %p71 = scmp.ne.s32.totalorder %s60, %s63
      %p72 = scmp.eq.s32.totalorder %s15, 3
      %p73 = por %p71, %p72
      %p74 = scmp.ne.s32.totalorder %s63, %s64
      %p75 = scmp.eq.s32.totalorder %s15, 0
      %p76 = por %p74, %p75
      %p77 = scmp.ne.s32.totalorder %s63, %s64
      %p78 = scmp.eq.s32.totalorder %s16, 3
      %p79 = por %p77, %p78
      %p81 = scmp.ne.s32.totalorder %s64, %s80
      %p82 = scmp.eq.s32.totalorder %s16, 0
      %p83 = por %p81, %p82
      %s85 = sadd.s32 %s84, 1
      %p88 = scmp.eq.s32.totalorder %s10, 3
      %p89 = scmp.ne.s32.totalorder %s84, %s86
      %p90 = scmp.eq.s32.totalorder %s10, 0
      %p91 = por %p89, %p90
      %p92 = scmp.ne.s32.totalorder %s84, %s86
      %p93 = scmp.eq.s32.totalorder %s15, 3
      %p94 = por %p92, %p93
      %p95 = scmp.ne.s32.totalorder %s86, %s87
      %p96 = scmp.eq.s32.totalorder %s15, 0
      %p97 = por %p95, %p96
      %p98 = scmp.ne.s32.totalorder %s86, %s87
      %p99 = scmp.eq.s32.totalorder %s16, 3
      %p100 = por %p98, %p99
      %p102 = scmp.ne.s32.totalorder %s87, %s101
      %p103 = scmp.eq.s32.totalorder %s16, 0
      %p104 = por %p102, %p103
      %s106 = sadd.s32 %s105, 1
      %p109 = scmp.eq.s32.totalorder %s10, 3
      %p110 = scmp.ne.s32.totalorder %s105, %s107
      %p111 = scmp.eq.s32.totalorder %s10, 0
      %p112 = por %p110, %p111
      %p113 = scmp.ne.s32.totalorder %s105, %s107
      %p114 = scmp.eq.s32.totalorder %s15, 3
      %p115 = por %p113, %p114
      %p116 = scmp.ne.s32.totalorder %s107, %s108
      %p117 = scmp.eq.s32.totalorder %s15, 0
      %p118 = por %p116, %p117
      %p119 = scmp.ne.s32.totalorder %s107, %s108
      %p120 = scmp.eq.s32.totalorder %s16, 3
      %p121 = por %p119, %p120
      %p123 = scmp.ne.s32.totalorder %s108, %s122
      %p124 = scmp.eq.s32.totalorder %s16, 0
      %p125 = por %p123, %p124
      %s126 = ssub.s32 %s17, %s29
      %p127 = scmp.eq.s32.totalorder %s126, 0
      %s129 = sadd.s32 %s128, 1
      %s130 = scalar_select %p127, %s128, %s129
      %p133 = pneg %p127
      %p134 = scmp.eq.s32.totalorder %s10, 3
      %p135 = por %p133, %p134
      %p136 = scmp.ne.s32.totalorder %s128, %s131
      %p137 = scmp.eq.s32.totalorder %s10, 0
      %p138 = por %p136, %p137
      %p139 = scmp.ne.s32.totalorder %s128, %s131
      %p140 = scmp.eq.s32.totalorder %s15, 3
      %p141 = por %p139, %p140
      %p142 = scmp.ne.s32.totalorder %s131, %s132
      %p143 = scmp.eq.s32.totalorder %s15, 0
      %p144 = por %p142, %p143
      %p145 = scmp.ne.s32.totalorder %s131, %s132
      %p146 = scmp.eq.s32.totalorder %s16, 3
      %p147 = por %p145, %p146
      %p149 = scmp.ne.s32.totalorder %s132, %s148
      %p150 = scmp.eq.s32.totalorder %s16, 0
      %p151 = por %p149, %p150
      %p152 = scmp.le.s32.totalorder 1, %s10
      %p153 = scmp.lt.s32.totalorder %s10, 5
      %p154 = pnand %p152, %p153
      %p155 = pneg %p154
      // Predicated region
      $region9: #{gnn_forward.2} parent=5 // pred_check
        _
      $region10: #{gnn_forward.2} parent=5 // pred_check_branch
        %157 = sbr.rel (%p154) target = $region12
      $region11: #{gnn_forward.2} parent=5 // pred_region
        %s158 = ssub.s32 %s10, 1
        // Predicated region
        $region13: #{gnn_forward.2} parent=11 // pred_check
          %p159 = pneg %p97
        $region14: #{gnn_forward.2} parent=11 // pred_check_branch
          %161 = sbr.rel (%p159) target = $region16
        $region15: #{gnn_forward.2} parent=11 // pred_region
          _
        $region16: #{gnn_forward.2} parent=11 // pred_fallthru
          _
        // Predicated region
        $region17: #{gnn_forward.2} parent=11 // pred_check
          %p162 = pneg %p118
        $region18: #{gnn_forward.2} parent=11 // pred_check_branch
          %164 = sbr.rel (%p162) target = $region20
        $region19: #{gnn_forward.2} parent=11 // pred_region
          _
        $region20: #{gnn_forward.2} parent=11 // pred_fallthru
          _
      $region12: #{gnn_forward.2} parent=5 // pred_fallthru
        _
      %p165 = scmp.lt.s32.totalorder %s10, 4
      // Predicated region
      $region21: #{gnn_forward.2} parent=5 // pred_check
        %p166 = pneg %p165
      $region22: #{gnn_forward.2} parent=5 // pred_check_branch
        %168 = sbr.rel (%p166) target = $region24
      $region23: #{gnn_forward.2} parent=5 // pred_region
        // Predicated region
        $region25: #{gnn_forward.2} parent=23 // pred_check
          %p169 = pneg %p44
        $region26: #{gnn_forward.2} parent=23 // pred_check_branch
          %171 = sbr.rel (%p169) target = $region28
        $region27: #{gnn_forward.2} parent=23 // pred_region
          %s172 = sand.u32 %s34, 1
          %s173 = sand.u32 %s34, 1
          %s174 = smul.addr %s173, 256
          %s175 = scalar_lea.vmem [#allocation3], %s174
          %s176 = smul.u32 32, %s17
          %s177 = smul.u32 2, %s18
          %s178 = smul.addr %s176, 4
          %s179 = sadd.s32 %s177, %s178
          %s180 = smul.addr %s179, 4
          %s181 = scalar_lea.vmem %s0, %s180
          // Predicated region
          $region29: #{gnn_forward.2} parent=27 // pred_check
            _
          $region30: #{gnn_forward.2} parent=27 // pred_check_branch
            %183 = sbr.rel (0) target = $region32
          $region31: #{gnn_forward.2} parent=27 // pred_region
            // Predicated region
            $region33: #{gnn_forward.2} parent=31 // pred_check
              _
            $region34: #{gnn_forward.2} parent=31 // pred_check_branch
              %185 = sbr.rel (0) target = $region36
            $region35: #{gnn_forward.2} parent=31 // pred_region
              // Predicated region
              $region48: #{gnn_forward.2} parent=35 // pred_check
                _
              $region49: #{gnn_forward.2} parent=35 // pred_check_branch
                %262 = sbr.rel (0) target = $region51
              $region50: #{gnn_forward.2} parent=35 // pred_region
                loop: start=0, step=1, limit=1
                $region52: #{gnn_forward.2} parent=50 // loop_pre_header
                  _
                $region53: #{gnn_forward.2} parent=50 // loop_header
                  %s264 = sphi 0, %s268
                  %p265 = scmp.ge.s32.totalorder %s264, 1
                  %s269 = sphi %s181, %s181
                  %s270 = sphi %s175, %s175
                $region54: #{gnn_forward.2} parent=50 // loop_header_branch
                  %267 = sbr.rel (%p265) target = $region58
                $region55: #{gnn_forward.2} parent=50 // loop_body
                  %v271 = vld [vmem:[%s269] sm:$0xff]
                  %272 = vst [vmem:[%s270] sm:$0xff] %v271
                  %v273 = vld [vmem:[%s269 + $0x10] sm:$0xff]
                  %274 = vst [vmem:[%s270 + $0x8] sm:$0xff] %v273
                  %v275 = vld [vmem:[%s269 + $0x20] sm:$0xff]
                  %276 = vst [vmem:[%s270 + $0x10] sm:$0xff] %v275
                  %v277 = vld [vmem:[%s269 + $0x30] sm:$0xff]
                  %278 = vst [vmem:[%s270 + $0x18] sm:$0xff] %v277
                  %v279 = vld [vmem:[%s269 + $0x40] sm:$0xff]
                  %280 = vst [vmem:[%s270 + $0x20] sm:$0xff] %v279
                  %v281 = vld [vmem:[%s269 + $0x50] sm:$0xff]
                  %282 = vst [vmem:[%s270 + $0x28] sm:$0xff] %v281
                  %v283 = vld [vmem:[%s269 + $0x60] sm:$0xff]
                  %284 = vst [vmem:[%s270 + $0x30] sm:$0xff] %v283
                  %v285 = vld [vmem:[%s269 + $0x70] sm:$0xff]
                  %286 = vst [vmem:[%s270 + $0x38] sm:$0xff] %v285
                  %v287 = vld [vmem:[%s269 + $0x80] sm:$0xff]
                  %288 = vst [vmem:[%s270 + $0x40] sm:$0xff] %v287
                  %v289 = vld [vmem:[%s269 + $0x90] sm:$0xff]
                  %290 = vst [vmem:[%s270 + $0x48] sm:$0xff] %v289
                  %v291 = vld [vmem:[%s269 + $0xa0] sm:$0xff]
                  %292 = vst [vmem:[%s270 + $0x50] sm:$0xff] %v291
                  %v293 = vld [vmem:[%s269 + $0xb0] sm:$0xff]
                  %294 = vst [vmem:[%s270 + $0x58] sm:$0xff] %v293
                  %v295 = vld [vmem:[%s269 + $0xc0] sm:$0xff]
                  %296 = vst [vmem:[%s270 + $0x60] sm:$0xff] %v295
                  %v297 = vld [vmem:[%s269 + $0xd0] sm:$0xff]
                  %298 = vst [vmem:[%s270 + $0x68] sm:$0xff] %v297
                  %v299 = vld [vmem:[%s269 + $0xe0] sm:$0xff]
                  %300 = vst [vmem:[%s270 + $0x70] sm:$0xff] %v299
                  %v301 = vld [vmem:[%s269 + $0xf0] sm:$0xff]
                  %302 = vst [vmem:[%s270 + $0x78] sm:$0xff] %v301
                  %v303 = vld [vmem:[%s269 + $0x100] sm:$0xff]
                  %304 = vst [vmem:[%s270 + $0x80] sm:$0xff] %v303
                  %v305 = vld [vmem:[%s269 + $0x110] sm:$0xff]
                  %306 = vst [vmem:[%s270 + $0x88] sm:$0xff] %v305
                  %v307 = vld [vmem:[%s269 + $0x120] sm:$0xff]
                  %308 = vst [vmem:[%s270 + $0x90] sm:$0xff] %v307
                  %v309 = vld [vmem:[%s269 + $0x130] sm:$0xff]
                  %310 = vst [vmem:[%s270 + $0x98] sm:$0xff] %v309
                  %v311 = vld [vmem:[%s269 + $0x140] sm:$0xff]
                  %312 = vst [vmem:[%s270 + $0xa0] sm:$0xff] %v311
                  %v313 = vld [vmem:[%s269 + $0x150] sm:$0xff]
                  %314 = vst [vmem:[%s270 + $0xa8] sm:$0xff] %v313
                  %v315 = vld [vmem:[%s269 + $0x160] sm:$0xff]
                  %316 = vst [vmem:[%s270 + $0xb0] sm:$0xff] %v315
                  %v317 = vld [vmem:[%s269 + $0x170] sm:$0xff]
                  %318 = vst [vmem:[%s270 + $0xb8] sm:$0xff] %v317
                  %v319 = vld [vmem:[%s269 + $0x180] sm:$0xff]
                  %320 = vst [vmem:[%s270 + $0xc0] sm:$0xff] %v319
                  %v321 = vld [vmem:[%s269 + $0x190] sm:$0xff]
                  %322 = vst [vmem:[%s270 + $0xc8] sm:$0xff] %v321
                  %v323 = vld [vmem:[%s269 + $0x1a0] sm:$0xff]
                  %324 = vst [vmem:[%s270 + $0xd0] sm:$0xff] %v323
                  %v325 = vld [vmem:[%s269 + $0x1b0] sm:$0xff]
                  %326 = vst [vmem:[%s270 + $0xd8] sm:$0xff] %v325
                  %v327 = vld [vmem:[%s269 + $0x1c0] sm:$0xff]
                  %328 = vst [vmem:[%s270 + $0xe0] sm:$0xff] %v327
                  %v329 = vld [vmem:[%s269 + $0x1d0] sm:$0xff]
                  %330 = vst [vmem:[%s270 + $0xe8] sm:$0xff] %v329
                  %v331 = vld [vmem:[%s269 + $0x1e0] sm:$0xff]
                  %332 = vst [vmem:[%s270 + $0xf0] sm:$0xff] %v331
                  %v333 = vld [vmem:[%s269 + $0x1f0] sm:$0xff]
                  %334 = vst [vmem:[%s270 + $0xf8] sm:$0xff] %v333
                $region56: #{gnn_forward.2} parent=50 // loop_footer
                  %s268 = sadd.s32 1, %s264
                $region57: #{gnn_forward.2} parent=50 // loop_footer_branch
                  %263 = sbr.rel target = $region53
                $region58: #{gnn_forward.2} parent=50 // loop_exit
                  _
              $region51: #{gnn_forward.2} parent=35 // pred_fallthru
                _
              // Predicated region
              $region59: #{gnn_forward.2} parent=35 // pred_check
                _
              $region60: #{gnn_forward.2} parent=35 // pred_check_branch
                %336 = sbr.rel target = $region62
              $region61: #{gnn_forward.2} parent=35 // pred_region
                _
              $region62: #{gnn_forward.2} parent=35 // pred_fallthru
                _
            $region36: #{gnn_forward.2} parent=31 // pred_fallthru
              _
            // Predicated region
            $region37: #{gnn_forward.2} parent=31 // pred_check
              _
            $region38: #{gnn_forward.2} parent=31 // pred_check_branch
              %187 = sbr.rel target = $region40
            $region39: #{gnn_forward.2} parent=31 // pred_region
              loop: start=0, step=1, limit=1
              $region41: #{gnn_forward.2} parent=39 // loop_pre_header
                _
              $region42: #{gnn_forward.2} parent=39 // loop_header
                %s190 = sphi 0, %s194
                %p191 = scmp.ge.s32.totalorder %s190, 1
                %s195 = sphi %s181, %s181
                %s196 = sphi %s175, %s175
              $region43: #{gnn_forward.2} parent=39 // loop_header_branch
                %193 = sbr.rel (%p191) target = $region47
              $region44: #{gnn_forward.2} parent=39 // loop_body
                %v197 = vld [vmem:[%s195] sm:$0xff]
                %198 = vst [vmem:[%s196] sm:$0xff] %v197
                %v199 = vld [vmem:[%s195 + $0x10] sm:$0xff]
                %200 = vst [vmem:[%s196 + $0x8] sm:$0xff] %v199
                %v201 = vld [vmem:[%s195 + $0x20] sm:$0xff]
                %202 = vst [vmem:[%s196 + $0x10] sm:$0xff] %v201
                %v203 = vld [vmem:[%s195 + $0x30] sm:$0xff]
                %204 = vst [vmem:[%s196 + $0x18] sm:$0xff] %v203
                %v205 = vld [vmem:[%s195 + $0x40] sm:$0xff]
                %206 = vst [vmem:[%s196 + $0x20] sm:$0xff] %v205
                %v207 = vld [vmem:[%s195 + $0x50] sm:$0xff]
                %208 = vst [vmem:[%s196 + $0x28] sm:$0xff] %v207
                %v209 = vld [vmem:[%s195 + $0x60] sm:$0xff]
                %210 = vst [vmem:[%s196 + $0x30] sm:$0xff] %v209
                %v211 = vld [vmem:[%s195 + $0x70] sm:$0xff]
                %212 = vst [vmem:[%s196 + $0x38] sm:$0xff] %v211
                %v213 = vld [vmem:[%s195 + $0x80] sm:$0xff]
                %214 = vst [vmem:[%s196 + $0x40] sm:$0xff] %v213
                %v215 = vld [vmem:[%s195 + $0x90] sm:$0xff]
                %216 = vst [vmem:[%s196 + $0x48] sm:$0xff] %v215
                %v217 = vld [vmem:[%s195 + $0xa0] sm:$0xff]
                %218 = vst [vmem:[%s196 + $0x50] sm:$0xff] %v217
                %v219 = vld [vmem:[%s195 + $0xb0] sm:$0xff]
                %220 = vst [vmem:[%s196 + $0x58] sm:$0xff] %v219
                %v221 = vld [vmem:[%s195 + $0xc0] sm:$0xff]
                %222 = vst [vmem:[%s196 + $0x60] sm:$0xff] %v221
                %v223 = vld [vmem:[%s195 + $0xd0] sm:$0xff]
                %224 = vst [vmem:[%s196 + $0x68] sm:$0xff] %v223
                %v225 = vld [vmem:[%s195 + $0xe0] sm:$0xff]
                %226 = vst [vmem:[%s196 + $0x70] sm:$0xff] %v225
                %v227 = vld [vmem:[%s195 + $0xf0] sm:$0xff]
                %228 = vst [vmem:[%s196 + $0x78] sm:$0xff] %v227
                %v229 = vld [vmem:[%s195 + $0x100] sm:$0xff]
                %230 = vst [vmem:[%s196 + $0x80] sm:$0xff] %v229
                %v231 = vld [vmem:[%s195 + $0x110] sm:$0xff]
                %232 = vst [vmem:[%s196 + $0x88] sm:$0xff] %v231
                %v233 = vld [vmem:[%s195 + $0x120] sm:$0xff]
                %234 = vst [vmem:[%s196 + $0x90] sm:$0xff] %v233
                %v235 = vld [vmem:[%s195 + $0x130] sm:$0xff]
                %236 = vst [vmem:[%s196 + $0x98] sm:$0xff] %v235
                %v237 = vld [vmem:[%s195 + $0x140] sm:$0xff]
                %238 = vst [vmem:[%s196 + $0xa0] sm:$0xff] %v237
                %v239 = vld [vmem:[%s195 + $0x150] sm:$0xff]
                %240 = vst [vmem:[%s196 + $0xa8] sm:$0xff] %v239
                %v241 = vld [vmem:[%s195 + $0x160] sm:$0xff]
                %242 = vst [vmem:[%s196 + $0xb0] sm:$0xff] %v241
                %v243 = vld [vmem:[%s195 + $0x170] sm:$0xff]
                %244 = vst [vmem:[%s196 + $0xb8] sm:$0xff] %v243
                %v245 = vld [vmem:[%s195 + $0x180] sm:$0xff]
                %246 = vst [vmem:[%s196 + $0xc0] sm:$0xff] %v245
                %v247 = vld [vmem:[%s195 + $0x190] sm:$0xff]
                %248 = vst [vmem:[%s196 + $0xc8] sm:$0xff] %v247
                %v249 = vld [vmem:[%s195 + $0x1a0] sm:$0xff]
                %250 = vst [vmem:[%s196 + $0xd0] sm:$0xff] %v249
                %v251 = vld [vmem:[%s195 + $0x1b0] sm:$0xff]
                %252 = vst [vmem:[%s196 + $0xd8] sm:$0xff] %v251
                %v253 = vld [vmem:[%s195 + $0x1c0] sm:$0xff]
                %254 = vst [vmem:[%s196 + $0xe0] sm:$0xff] %v253
                %v255 = vld [vmem:[%s195 + $0x1d0] sm:$0xff]
                %256 = vst [vmem:[%s196 + $0xe8] sm:$0xff] %v255
                %v257 = vld [vmem:[%s195 + $0x1e0] sm:$0xff]
                %258 = vst [vmem:[%s196 + $0xf0] sm:$0xff] %v257
                %v259 = vld [vmem:[%s195 + $0x1f0] sm:$0xff]
                %260 = vst [vmem:[%s196 + $0xf8] sm:$0xff] %v259
              $region45: #{gnn_forward.2} parent=39 // loop_footer
                %s194 = sadd.s32 1, %s190
              $region46: #{gnn_forward.2} parent=39 // loop_footer_branch
                %189 = sbr.rel target = $region42
              $region47: #{gnn_forward.2} parent=39 // loop_exit
                _
            $region40: #{gnn_forward.2} parent=31 // pred_fallthru
              _
          $region32: #{gnn_forward.2} parent=27 // pred_fallthru
            _
          %337 = vnop
        $region28: #{gnn_forward.2} parent=23 // pred_fallthru
          _
        // Predicated region
        $region63: #{gnn_forward.2} parent=23 // pred_check
          %p338 = pneg %p70
        $region64: #{gnn_forward.2} parent=23 // pred_check_branch
          %340 = sbr.rel (%p338) target = $region66
        $region65: #{gnn_forward.2} parent=23 // pred_region
          %s341 = smul.u32 32, %s18
          %p342 = scmp.lt.s32.totalorder %s341, 63
          %s343 = scalar_select %p342, %s341, 63
          %s344 = smul.addr %s343, 4
          %s345 = scalar_lea.vmem %s1, %s344
          %s346 = smul.u32 32, %s18
        $region66: #{gnn_forward.2} parent=23 // pred_fallthru
          _
      $region24: #{gnn_forward.2} parent=5 // pred_fallthru
        _
      %p347 = scmp.le.s32.totalorder 1, %s10
      %p348 = scmp.lt.s32.totalorder %s10, 5
      %p349 = pnand %p347, %p348
      %p350 = pneg %p349
      // Predicated region
      $region67: #{gnn_forward.2} parent=5 // pred_check
        _
      $region68: #{gnn_forward.2} parent=5 // pred_check_branch
        %352 = sbr.rel (%p349) target = $region70
      $region69: #{gnn_forward.2} parent=5 // pred_region
        %s353 = ssub.s32 %s10, 1
        %s354 = sand.u32 %s37, 1
        %s355 = sand.u32 %s37, 1
        %s356 = smul.addr %s355, 256
        %s357 = scalar_lea.vmem [#allocation3], %s356
        // Predicated region
        $region71: #{gnn_forward.2} parent=69 // pred_check
          %p358 = pneg %p50
        $region72: #{gnn_forward.2} parent=69 // pred_check_branch
          %360 = sbr.rel (%p358) target = $region74
        $region73: #{gnn_forward.2} parent=69 // pred_region
          _
        $region74: #{gnn_forward.2} parent=69 // pred_fallthru
          _
        %s361 = sand.u32 %s37, 1
        %s362 = sand.u32 %s37, 1
        %s363 = smul.addr %s362, 256
        %s364 = scalar_lea.vmem [#allocation3], %s363
        %p365 = pneg %p50
        %p366 = pneg %p47
        %s367 = smul.u32 32, %s20
        %p368 = scmp.lt.s32.totalorder %s367, 63
        %s369 = scalar_select %p368, %s367, 63
        %s370 = smul.addr %s369, 4
        %s371 = scalar_lea.vmem %s1, %s370
        %p372 = pneg %p76
        %p373 = pneg %p73
        %p374 = pneg %p97
        %p375 = pneg %p94
        %p376 = pneg %p118
        %p377 = pneg %p115
        %p378 = pneg %p144
        %p379 = pneg %p141
        %s380 = smul.u32 32, %s19
        %p381 = scmp.lt.s32.totalorder %s380, 63
        %s382 = scalar_select %p381, %s380, 63
        %s383 = smul.addr %s382, 4
        %s384 = scalar_lea.vmem %s4, %s383
        %s385 = smul.u32 32, %s19
        %s386 = smul.u32 2, %s20
        %s387 = smul.u32 32, %s20
        %p388 = scmp.lt.s32.totalorder %s387, 63
        %s389 = scalar_select %p388, %s387, 63
        %s390 = smul.addr %s389, 4
        %s391 = scalar_lea.vmem %s1, %s390
        %s392 = smul.u32 32, %s20
        %s393 = smul.u32 32, %s19
        %p394 = scmp.lt.s32.totalorder %s393, 63
        %s395 = scalar_select %p394, %s393, 63
        %s396 = smul.addr %s395, 4
        %s397 = scalar_lea.vmem %s4, %s396
        %s398 = smul.u32 32, %s19
        %p400 = scmp.eq.s32.totalorder %s20, 0
        // Predicated region
        $region75: #{gnn_forward.2} parent=69 // pred_check
          %p401 = pneg %p400
        $region76: #{gnn_forward.2} parent=69 // pred_check_branch
          %403 = sbr.rel (%p401) target = $region78
        $region77: #{gnn_forward.2} parent=69 // pred_region
          %404 = vst [vmem:[#allocation2] sm:$0xff] 0.0
          %405 = vst [vmem:[#allocation2 + $0x8] sm:$0xff] 0.0
          %406 = vst [vmem:[#allocation2 + $0x10] sm:$0xff] 0.0
          %407 = vst [vmem:[#allocation2 + $0x18] sm:$0xff] 0.0
          %408 = vst [vmem:[#allocation2 + $0x20] sm:$0xff] 0.0
          %409 = vst [vmem:[#allocation2 + $0x28] sm:$0xff] 0.0
          %410 = vst [vmem:[#allocation2 + $0x30] sm:$0xff] 0.0
          %411 = vst [vmem:[#allocation2 + $0x38] sm:$0xff] 0.0
          %412 = vst [vmem:[#allocation2 + $0x40] sm:$0xff] 0.0
          %413 = vst [vmem:[#allocation2 + $0x48] sm:$0xff] 0.0
          %414 = vst [vmem:[#allocation2 + $0x50] sm:$0xff] 0.0
          %415 = vst [vmem:[#allocation2 + $0x58] sm:$0xff] 0.0
          %416 = vst [vmem:[#allocation2 + $0x60] sm:$0xff] 0.0
          %417 = vst [vmem:[#allocation2 + $0x68] sm:$0xff] 0.0
          %418 = vst [vmem:[#allocation2 + $0x70] sm:$0xff] 0.0
          %419 = vst [vmem:[#allocation2 + $0x78] sm:$0xff] 0.0
          %420 = vst [vmem:[#allocation2 + $0x80] sm:$0xff] 0.0
          %421 = vst [vmem:[#allocation2 + $0x88] sm:$0xff] 0.0
          %422 = vst [vmem:[#allocation2 + $0x90] sm:$0xff] 0.0
          %423 = vst [vmem:[#allocation2 + $0x98] sm:$0xff] 0.0
          %424 = vst [vmem:[#allocation2 + $0xa0] sm:$0xff] 0.0
          %425 = vst [vmem:[#allocation2 + $0xa8] sm:$0xff] 0.0
          %426 = vst [vmem:[#allocation2 + $0xb0] sm:$0xff] 0.0
          %427 = vst [vmem:[#allocation2 + $0xb8] sm:$0xff] 0.0
          %428 = vst [vmem:[#allocation2 + $0xc0] sm:$0xff] 0.0
          %429 = vst [vmem:[#allocation2 + $0xc8] sm:$0xff] 0.0
          %430 = vst [vmem:[#allocation2 + $0xd0] sm:$0xff] 0.0
          %431 = vst [vmem:[#allocation2 + $0xd8] sm:$0xff] 0.0
          %432 = vst [vmem:[#allocation2 + $0xe0] sm:$0xff] 0.0
          %433 = vst [vmem:[#allocation2 + $0xe8] sm:$0xff] 0.0
          %434 = vst [vmem:[#allocation2 + $0xf0] sm:$0xff] 0.0
          %435 = vst [vmem:[#allocation2 + $0xf8] sm:$0xff] 0.0
        $region78: #{gnn_forward.2} parent=69 // pred_fallthru
          _
        %v436 = vld [vmem:[#allocation2] sm:$0xff]
        %v437 = vld [vmem:[#allocation2 + $0x8] sm:$0xff]
        %v438 = vld [vmem:[#allocation2 + $0x10] sm:$0xff]
        %v439 = vld [vmem:[#allocation2 + $0x18] sm:$0xff]
        %v440 = vld [vmem:[#allocation2 + $0x20] sm:$0xff]
        %v441 = vld [vmem:[#allocation2 + $0x28] sm:$0xff]
        %v442 = vld [vmem:[#allocation2 + $0x30] sm:$0xff]
        %v443 = vld [vmem:[#allocation2 + $0x38] sm:$0xff]
        %v444 = vld [vmem:[#allocation2 + $0x40] sm:$0xff]
        %v445 = vld [vmem:[#allocation2 + $0x48] sm:$0xff]
        %v446 = vld [vmem:[#allocation2 + $0x50] sm:$0xff]
        %v447 = vld [vmem:[#allocation2 + $0x58] sm:$0xff]
        %v448 = vld [vmem:[#allocation2 + $0x60] sm:$0xff]
        %v449 = vld [vmem:[#allocation2 + $0x68] sm:$0xff]
        %v450 = vld [vmem:[#allocation2 + $0x70] sm:$0xff]
        %v451 = vld [vmem:[#allocation2 + $0x78] sm:$0xff]
        %v452 = vld [vmem:[#allocation2 + $0x80] sm:$0xff]
        %v453 = vld [vmem:[#allocation2 + $0x88] sm:$0xff]
        %v454 = vld [vmem:[#allocation2 + $0x90] sm:$0xff]
        %v455 = vld [vmem:[#allocation2 + $0x98] sm:$0xff]
        %v456 = vld [vmem:[#allocation2 + $0xa0] sm:$0xff]
        %v457 = vld [vmem:[#allocation2 + $0xa8] sm:$0xff]
        %v458 = vld [vmem:[#allocation2 + $0xb0] sm:$0xff]
        %v459 = vld [vmem:[#allocation2 + $0xb8] sm:$0xff]
        %v460 = vld [vmem:[#allocation2 + $0xc0] sm:$0xff]
        %v461 = vld [vmem:[#allocation2 + $0xc8] sm:$0xff]
        %v462 = vld [vmem:[#allocation2 + $0xd0] sm:$0xff]
        %v463 = vld [vmem:[#allocation2 + $0xd8] sm:$0xff]
        %v464 = vld [vmem:[#allocation2 + $0xe0] sm:$0xff]
        %v465 = vld [vmem:[#allocation2 + $0xe8] sm:$0xff]
        %v466 = vld [vmem:[#allocation2 + $0xf0] sm:$0xff]
        %v467 = vld [vmem:[#allocation2 + $0xf8] sm:$0xff]
        %v468 = vld [vmem:[%s357] sm:$0xff]
        %v469 = vld [vmem:[%s357 + $0x8] sm:$0xff]
        %v470 = vld [vmem:[%s357 + $0x10] sm:$0xff]
        %v471 = vld [vmem:[%s357 + $0x18] sm:$0xff]
        %v472 = vld [vmem:[%s357 + $0x20] sm:$0xff]
        %v473 = vld [vmem:[%s357 + $0x28] sm:$0xff]
        %v474 = vld [vmem:[%s357 + $0x30] sm:$0xff]
        %v475 = vld [vmem:[%s357 + $0x38] sm:$0xff]
        %v476 = vld [vmem:[%s357 + $0x40] sm:$0xff]
        %v477 = vld [vmem:[%s357 + $0x48] sm:$0xff]
        %v478 = vld [vmem:[%s357 + $0x50] sm:$0xff]
        %v479 = vld [vmem:[%s357 + $0x58] sm:$0xff]
        %v480 = vld [vmem:[%s357 + $0x60] sm:$0xff]
        %v481 = vld [vmem:[%s357 + $0x68] sm:$0xff]
        %v482 = vld [vmem:[%s357 + $0x70] sm:$0xff]
        %v483 = vld [vmem:[%s357 + $0x78] sm:$0xff]
        %v484 = vld [vmem:[%s357 + $0x80] sm:$0xff]
        %v485 = vld [vmem:[%s357 + $0x88] sm:$0xff]
        %v486 = vld [vmem:[%s357 + $0x90] sm:$0xff]
        %v487 = vld [vmem:[%s357 + $0x98] sm:$0xff]
        %v488 = vld [vmem:[%s357 + $0xa0] sm:$0xff]
        %v489 = vld [vmem:[%s357 + $0xa8] sm:$0xff]
        %v490 = vld [vmem:[%s357 + $0xb0] sm:$0xff]
        %v491 = vld [vmem:[%s357 + $0xb8] sm:$0xff]
        %v492 = vld [vmem:[%s357 + $0xc0] sm:$0xff]
        %v493 = vld [vmem:[%s357 + $0xc8] sm:$0xff]
        %v494 = vld [vmem:[%s357 + $0xd0] sm:$0xff]
        %v495 = vld [vmem:[%s357 + $0xd8] sm:$0xff]
        %v496 = vld [vmem:[%s357 + $0xe0] sm:$0xff]
        %v497 = vld [vmem:[%s357 + $0xe8] sm:$0xff]
        %v498 = vld [vmem:[%s357 + $0xf0] sm:$0xff]
        %v499 = vld [vmem:[%s357 + $0xf8] sm:$0xff]
        %v500 = vld [vmem:[%s391] sm:$0xf]
        %v501 = vld [vmem:[%s391 + $0x4] sm:$0xf]
        %v502 = vld [vmem:[%s391 + $0x8] sm:$0xf]
        %v503 = vld [vmem:[%s391 + $0xc] sm:$0xf]
        %v504 = vld [vmem:[%s391 + $0x10] sm:$0xf]
        %v505 = vld [vmem:[%s391 + $0x14] sm:$0xf]
        %v506 = vld [vmem:[%s391 + $0x18] sm:$0xf]
        %v507 = vld [vmem:[%s391 + $0x1c] sm:$0xf]
        %v508 = vld [vmem:[%s391 + $0x20] sm:$0xf]
        %v509 = vld [vmem:[%s391 + $0x24] sm:$0xf]
        %v510 = vld [vmem:[%s391 + $0x28] sm:$0xf]
        %v511 = vld [vmem:[%s391 + $0x2c] sm:$0xf]
        %v512 = vld [vmem:[%s391 + $0x30] sm:$0xf]
        %v513 = vld [vmem:[%s391 + $0x34] sm:$0xf]
        %v514 = vld [vmem:[%s391 + $0x38] sm:$0xf]
        %v515 = vld [vmem:[%s391 + $0x3c] sm:$0xf]
        %v516 = vld [vmem:[%s391 + $0x40] sm:$0xf]
        %v517 = vld [vmem:[%s391 + $0x44] sm:$0xf]
        %v518 = vld [vmem:[%s391 + $0x48] sm:$0xf]
        %v519 = vld [vmem:[%s391 + $0x4c] sm:$0xf]
        %v520 = vld [vmem:[%s391 + $0x50] sm:$0xf]
        %v521 = vld [vmem:[%s391 + $0x54] sm:$0xf]
        %v522 = vld [vmem:[%s391 + $0x58] sm:$0xf]
        %v523 = vld [vmem:[%s391 + $0x5c] sm:$0xf]
        %v524 = vld [vmem:[%s391 + $0x60] sm:$0xf]
        %v525 = vld [vmem:[%s391 + $0x64] sm:$0xf]
        %v526 = vld [vmem:[%s391 + $0x68] sm:$0xf]
        %v527 = vld [vmem:[%s391 + $0x6c] sm:$0xf]
        %v528 = vld [vmem:[%s391 + $0x70] sm:$0xf]
        %v529 = vld [vmem:[%s391 + $0x74] sm:$0xf]
        %v530 = vld [vmem:[%s391 + $0x78] sm:$0xf]
        %v531 = vld [vmem:[%s391 + $0x7c] sm:$0xf]
        %v564 = vunpack.c.l.b16 %v468
        %v565 = vunpack.c.h.b16 %v468
        %v566 = vunpack.c.l.b16 %v469
        %v567 = vunpack.c.h.b16 %v469
        %v568 = vunpack.c.l.b16 %v470
        %v569 = vunpack.c.h.b16 %v470
        %v570 = vunpack.c.l.b16 %v471
        %v571 = vunpack.c.h.b16 %v471
        %v572 = vunpack.c.l.b16 %v472
        %v573 = vunpack.c.h.b16 %v472
        %v574 = vunpack.c.l.b16 %v473
        %v575 = vunpack.c.h.b16 %v473
        %v576 = vunpack.c.l.b16 %v474
        %v577 = vunpack.c.h.b16 %v474
        %v578 = vunpack.c.l.b16 %v475
        %v579 = vunpack.c.h.b16 %v475
        %v580 = vunpack.c.l.b16 %v476
        %v581 = vunpack.c.h.b16 %v476
        %v582 = vunpack.c.l.b16 %v477
        %v583 = vunpack.c.h.b16 %v477
        %v584 = vunpack.c.l.b16 %v478
        %v585 = vunpack.c.h.b16 %v478
        %v586 = vunpack.c.l.b16 %v479
        %v587 = vunpack.c.h.b16 %v479
        %v588 = vunpack.c.l.b16 %v480
        %v589 = vunpack.c.h.b16 %v480
        %v590 = vunpack.c.l.b16 %v481
        %v591 = vunpack.c.h.b16 %v481
        %v592 = vunpack.c.l.b16 %v482
        %v593 = vunpack.c.h.b16 %v482
        %v594 = vunpack.c.l.b16 %v483
        %v595 = vunpack.c.h.b16 %v483
        %v596 = vunpack.c.l.b16 %v484
        %v597 = vunpack.c.h.b16 %v484
        %v598 = vunpack.c.l.b16 %v485
        %v599 = vunpack.c.h.b16 %v485
        %v600 = vunpack.c.l.b16 %v486
        %v601 = vunpack.c.h.b16 %v486
        %v602 = vunpack.c.l.b16 %v487
        %v603 = vunpack.c.h.b16 %v487
        %v604 = vunpack.c.l.b16 %v488
        %v605 = vunpack.c.h.b16 %v488
        %v606 = vunpack.c.l.b16 %v489
        %v607 = vunpack.c.h.b16 %v489
        %v608 = vunpack.c.l.b16 %v490
        %v609 = vunpack.c.h.b16 %v490
        %v610 = vunpack.c.l.b16 %v491
        %v611 = vunpack.c.h.b16 %v491
        %v612 = vunpack.c.l.b16 %v492
        %v613 = vunpack.c.h.b16 %v492
        %v614 = vunpack.c.l.b16 %v493
        %v615 = vunpack.c.h.b16 %v493
        %v616 = vunpack.c.l.b16 %v494
        %v617 = vunpack.c.h.b16 %v494
        %v618 = vunpack.c.l.b16 %v495
        %v619 = vunpack.c.h.b16 %v495
        %v620 = vunpack.c.l.b16 %v496
        %v621 = vunpack.c.h.b16 %v496
        %v622 = vunpack.c.l.b16 %v497
        %v623 = vunpack.c.h.b16 %v497
        %v624 = vunpack.c.l.b16 %v498
        %v625 = vunpack.c.h.b16 %v498
        %v626 = vunpack.c.l.b16 %v499
        %v627 = vunpack.c.h.b16 %v499
        %v628 = vpack.c.b16 %v566, %v564
        %v629 = vpack.c.b16 %v567, %v565
        %v630 = vpack.c.b16 %v570, %v568
        %v631 = vpack.c.b16 %v571, %v569
        %v632 = vpack.c.b16 %v574, %v572
        %v633 = vpack.c.b16 %v575, %v573
        %v634 = vpack.c.b16 %v578, %v576
        %v635 = vpack.c.b16 %v579, %v577
        %v636 = vpack.c.b16 %v582, %v580
        %v637 = vpack.c.b16 %v583, %v581
        %v638 = vpack.c.b16 %v586, %v584
        %v639 = vpack.c.b16 %v587, %v585
        %v640 = vpack.c.b16 %v590, %v588
        %v641 = vpack.c.b16 %v591, %v589
        %v642 = vpack.c.b16 %v594, %v592
        %v643 = vpack.c.b16 %v595, %v593
        %v644 = vpack.c.b16 %v598, %v596
        %v645 = vpack.c.b16 %v599, %v597
        %v646 = vpack.c.b16 %v602, %v600
        %v647 = vpack.c.b16 %v603, %v601
        %v648 = vpack.c.b16 %v606, %v604
        %v649 = vpack.c.b16 %v607, %v605
        %v650 = vpack.c.b16 %v610, %v608
        %v651 = vpack.c.b16 %v611, %v609
        %v652 = vpack.c.b16 %v614, %v612
        %v653 = vpack.c.b16 %v615, %v613
        %v654 = vpack.c.b16 %v618, %v616
        %v655 = vpack.c.b16 %v619, %v617
        %v656 = vpack.c.b16 %v622, %v620
        %v657 = vpack.c.b16 %v623, %v621
        %v658 = vpack.c.b16 %v626, %v624
        %v659 = vpack.c.b16 %v627, %v625
        %v724 = vunpack.c.l.b16 %v500
        %v725 = vunpack.c.l.b16 %v501
        %v726 = vunpack.c.l.b16 %v502
        %v727 = vunpack.c.l.b16 %v503
        %v728 = vunpack.c.l.b16 %v504
        %v729 = vunpack.c.l.b16 %v505
        %v730 = vunpack.c.l.b16 %v506
        %v731 = vunpack.c.l.b16 %v507
        %v732 = vunpack.c.l.b16 %v508
        %v733 = vunpack.c.l.b16 %v509
        %v734 = vunpack.c.l.b16 %v510
        %v735 = vunpack.c.l.b16 %v511
        %v736 = vunpack.c.l.b16 %v512
        %v737 = vunpack.c.l.b16 %v513
        %v738 = vunpack.c.l.b16 %v514
        %v739 = vunpack.c.l.b16 %v515
        %v740 = vunpack.c.l.b16 %v516
        %v741 = vunpack.c.l.b16 %v517
        %v742 = vunpack.c.l.b16 %v518
        %v743 = vunpack.c.l.b16 %v519
        %v744 = vunpack.c.l.b16 %v520
        %v745 = vunpack.c.l.b16 %v521
        %v746 = vunpack.c.l.b16 %v522
        %v747 = vunpack.c.l.b16 %v523
        %v748 = vunpack.c.l.b16 %v524
        %v749 = vunpack.c.l.b16 %v525
        %v750 = vunpack.c.l.b16 %v526
        %v751 = vunpack.c.l.b16 %v527
        %v752 = vunpack.c.l.b16 %v528
        %v753 = vunpack.c.l.b16 %v529
        %v754 = vunpack.c.l.b16 %v530
        %v755 = vunpack.c.l.b16 %v531
        %v756 = vpack.c.b16 %v725, %v724
        %v757 = vpack.c.b16 %v727, %v726
        %v758 = vpack.c.b16 %v729, %v728
        %v759 = vpack.c.b16 %v731, %v730
        %v760 = vpack.c.b16 %v733, %v732
        %v761 = vpack.c.b16 %v735, %v734
        %v762 = vpack.c.b16 %v737, %v736
        %v763 = vpack.c.b16 %v739, %v738
        %v764 = vpack.c.b16 %v741, %v740
        %v765 = vpack.c.b16 %v743, %v742
        %v766 = vpack.c.b16 %v745, %v744
        %v767 = vpack.c.b16 %v747, %v746
        %v768 = vpack.c.b16 %v749, %v748
        %v769 = vpack.c.b16 %v751, %v750
        %v770 = vpack.c.b16 %v753, %v752
        %v771 = vpack.c.b16 %v755, %v754
        %788 = vmatprep.subr.bf16.mxu0 0
        %789 = vmatpush1.bf16.msra.mxu0 %v756
        %790 = vmatprep.subr.bf16.mxu0 0
        %791 = vmatpush1.bf16.msra.mxu0 %v757
        %792 = vmatprep.subr.bf16.mxu0 0
        %793 = vmatpush1.bf16.msra.mxu0 %v758
        %794 = vmatprep.subr.bf16.mxu0 0
        %795 = vmatpush1.bf16.msra.mxu0 %v759
        %796 = vmatprep.subr.bf16.mxu0 0
        %797 = vmatpush1.bf16.msra.mxu0 %v760
        %798 = vmatprep.subr.bf16.mxu0 0
        %799 = vmatpush1.bf16.msra.mxu0 %v761
        %800 = vmatprep.subr.bf16.mxu0 0
        %801 = vmatpush1.bf16.msra.mxu0 %v762
        %802 = vmatprep.subr.bf16.mxu0 0
        %803 = vmatpush1.bf16.msra.mxu0 %v763
        %804 = vmatprep.subr.bf16.mxu0 0
        %805 = vmatpush1.bf16.msra.mxu0 %v764
        %806 = vmatprep.subr.bf16.mxu0 0
        %807 = vmatpush1.bf16.msra.mxu0 %v765
        %808 = vmatprep.subr.bf16.mxu0 0
        %809 = vmatpush1.bf16.msra.mxu0 %v766
        %810 = vmatprep.subr.bf16.mxu0 0
        %811 = vmatpush1.bf16.msra.mxu0 %v767
        %812 = vmatprep.subr.bf16.mxu0 0
        %813 = vmatpush1.bf16.msra.mxu0 %v768
        %814 = vmatprep.subr.bf16.mxu0 0
        %815 = vmatpush1.bf16.msra.mxu0 %v769
        %816 = vmatprep.subr.bf16.mxu0 0
        %817 = vmatpush1.bf16.msra.mxu0 %v770
        %818 = vmatprep.subr.bf16.mxu0 0
        %819 = vmatpush1.bf16.msra.mxu0 %v771
        %820 = vmatprep.mubr.bf16.mxu0 %v629
        %821 = vmatmul.mubr.bf16.gmra.mrb[0].mxu0 %v628
        %v822 = vpop.f32.mrb[0].mxu0
        %v823 = vadd.f32 0.0, %v822
        %v824 = vpop.f32.mrb[0].mxu0
        %v825 = vpop.f32.mrb[0].mxu0
        %v826 = vadd.f32 0.0, %v825
        %v827 = vpop.f32.mrb[0].mxu0
        %828 = vmatprep.mubr.bf16.mxu0 %v631
        %829 = vmatmul.mubr.bf16.gmra.mrb[0].mxu0 %v630
        %v830 = vpop.f32.mrb[0].mxu0
        %v831 = vadd.f32 0.0, %v830
        %v832 = vpop.f32.mrb[0].mxu0
        %v833 = vpop.f32.mrb[0].mxu0
        %v834 = vadd.f32 0.0, %v833
        %v835 = vpop.f32.mrb[0].mxu0
        %836 = vmatprep.mubr.bf16.mxu0 %v633
        %837 = vmatmul.mubr.bf16.gmra.mrb[0].mxu0 %v632
        %v838 = vpop.f32.mrb[0].mxu0
        %v839 = vadd.f32 0.0, %v838
        %v840 = vpop.f32.mrb[0].mxu0
        %v841 = vpop.f32.mrb[0].mxu0
        %v842 = vadd.f32 0.0, %v841
        %v843 = vpop.f32.mrb[0].mxu0
        %844 = vmatprep.mubr.bf16.mxu0 %v635
        %845 = vmatmul.mubr.bf16.gmra.mrb[0].mxu0 %v634
        %v846 = vpop.f32.mrb[0].mxu0
        %v847 = vadd.f32 0.0, %v846
        %v848 = vpop.f32.mrb[0].mxu0
        %v849 = vpop.f32.mrb[0].mxu0
        %v850 = vadd.f32 0.0, %v849
        %v851 = vpop.f32.mrb[0].mxu0
        %852 = vmatprep.mubr.bf16.mxu0 %v637
        %853 = vmatmul.mubr.bf16.gmra.mrb[0].mxu0 %v636
        %v854 = vpop.f32.mrb[0].mxu0
        %v855 = vadd.f32 0.0, %v854
        %v856 = vpop.f32.mrb[0].mxu0
        %v857 = vpop.f32.mrb[0].mxu0
        %v858 = vadd.f32 0.0, %v857
        %v859 = vpop.f32.mrb[0].mxu0
        %860 = vmatprep.mubr.bf16.mxu0 %v639
        %861 = vmatmul.mubr.bf16.gmra.mrb[0].mxu0 %v638
        %v862 = vpop.f32.mrb[0].mxu0
        %v863 = vadd.f32 0.0, %v862
        %v864 = vpop.f32.mrb[0].mxu0
        %v865 = vpop.f32.mrb[0].mxu0
        %v866 = vadd.f32 0.0, %v865
        %v867 = vpop.f32.mrb[0].mxu0
        %868 = vmatprep.mubr.bf16.mxu0 %v641
        %869 = vmatmul.mubr.bf16.gmra.mrb[0].mxu0 %v640
        %v870 = vpop.f32.mrb[0].mxu0
        %v871 = vadd.f32 0.0, %v870
        %v872 = vpop.f32.mrb[0].mxu0
        %v873 = vpop.f32.mrb[0].mxu0
        %v874 = vadd.f32 0.0, %v873
        %v875 = vpop.f32.mrb[0].mxu0
        %876 = vmatprep.mubr.bf16.mxu0 %v643
        %877 = vmatmul.mubr.bf16.gmra.mrb[0].mxu0 %v642
        %v878 = vpop.f32.mrb[0].mxu0
        %v879 = vadd.f32 0.0, %v878
        %v880 = vpop.f32.mrb[0].mxu0
        %v881 = vpop.f32.mrb[0].mxu0
        %v882 = vadd.f32 0.0, %v881
        %v883 = vpop.f32.mrb[0].mxu0
        %884 = vmatprep.mubr.bf16.mxu0 %v645
        %885 = vmatmul.mubr.bf16.gmra.mrb[0].mxu0 %v644
        %v886 = vpop.f32.mrb[0].mxu0
        %v887 = vadd.f32 0.0, %v886
        %v888 = vpop.f32.mrb[0].mxu0
        %v889 = vpop.f32.mrb[0].mxu0
        %v890 = vadd.f32 0.0, %v889
        %v891 = vpop.f32.mrb[0].mxu0
        %892 = vmatprep.mubr.bf16.mxu0 %v647
        %893 = vmatmul.mubr.bf16.gmra.mrb[0].mxu0 %v646
        %v894 = vpop.f32.mrb[0].mxu0
        %v895 = vadd.f32 0.0, %v894
        %v896 = vpop.f32.mrb[0].mxu0
        %v897 = vpop.f32.mrb[0].mxu0
        %v898 = vadd.f32 0.0, %v897
        %v899 = vpop.f32.mrb[0].mxu0
        %900 = vmatprep.mubr.bf16.mxu0 %v649
        %901 = vmatmul.mubr.bf16.gmra.mrb[0].mxu0 %v648
        %v902 = vpop.f32.mrb[0].mxu0
        %v903 = vadd.f32 0.0, %v902
        %v904 = vpop.f32.mrb[0].mxu0
        %v905 = vpop.f32.mrb[0].mxu0
        %v906 = vadd.f32 0.0, %v905
        %v907 = vpop.f32.mrb[0].mxu0
        %908 = vmatprep.mubr.bf16.mxu0 %v651
        %909 = vmatmul.mubr.bf16.gmra.mrb[0].mxu0 %v650
        %v910 = vpop.f32.mrb[0].mxu0
        %v911 = vadd.f32 0.0, %v910
        %v912 = vpop.f32.mrb[0].mxu0
        %v913 = vpop.f32.mrb[0].mxu0
        %v914 = vadd.f32 0.0, %v913
        %v915 = vpop.f32.mrb[0].mxu0
        %916 = vmatprep.mubr.bf16.mxu0 %v653
        %917 = vmatmul.mubr.bf16.gmra.mrb[0].mxu0 %v652
        %v918 = vpop.f32.mrb[0].mxu0
        %v919 = vadd.f32 0.0, %v918
        %v920 = vpop.f32.mrb[0].mxu0
        %v921 = vpop.f32.mrb[0].mxu0
        %v922 = vadd.f32 0.0, %v921
        %v923 = vpop.f32.mrb[0].mxu0
        %924 = vmatprep.mubr.bf16.mxu0 %v655
        %925 = vmatmul.mubr.bf16.gmra.mrb[0].mxu0 %v654
        %v926 = vpop.f32.mrb[0].mxu0
        %v927 = vadd.f32 0.0, %v926
        %v928 = vpop.f32.mrb[0].mxu0
        %v929 = vpop.f32.mrb[0].mxu0
        %v930 = vadd.f32 0.0, %v929
        %v931 = vpop.f32.mrb[0].mxu0
        %932 = vmatprep.mubr.bf16.mxu0 %v657
        %933 = vmatmul.mubr.bf16.gmra.mrb[0].mxu0 %v656
        %v934 = vpop.f32.mrb[0].mxu0
        %v935 = vadd.f32 0.0, %v934
        %v936 = vpop.f32.mrb[0].mxu0
        %v937 = vpop.f32.mrb[0].mxu0
        %v938 = vadd.f32 0.0, %v937
        %v939 = vpop.f32.mrb[0].mxu0
        %940 = vmatprep.mubr.bf16.mxu0 %v659
        %941 = vmatmul.mubr.bf16.gmra.mrb[0].mxu0 %v658
        %v942 = vpop.f32.mrb[0].mxu0
        %v943 = vadd.f32 0.0, %v942
        %v944 = vpop.f32.mrb[0].mxu0
        %v945 = vpop.f32.mrb[0].mxu0
        %v946 = vadd.f32 0.0, %v945
        %v947 = vpop.f32.mrb[0].mxu0
        %948 = vdwg.mxu0
        %v949 = vadd.f32 %v436, %v823
        %v950 = vadd.f32 %v437, %v826
        %v951 = vadd.f32 %v438, %v831
        %v952 = vadd.f32 %v439, %v834
        %v953 = vadd.f32 %v440, %v839
        %v954 = vadd.f32 %v441, %v842
        %v955 = vadd.f32 %v442, %v847
        %v956 = vadd.f32 %v443, %v850
        %v957 = vadd.f32 %v444, %v855
        %v958 = vadd.f32 %v445, %v858
        %v959 = vadd.f32 %v446, %v863
        %v960 = vadd.f32 %v447, %v866
        %v961 = vadd.f32 %v448, %v871
        %v962 = vadd.f32 %v449, %v874
        %v963 = vadd.f32 %v450, %v879
        %v964 = vadd.f32 %v451, %v882
        %v965 = vadd.f32 %v452, %v887
        %v966 = vadd.f32 %v453, %v890
        %v967 = vadd.f32 %v454, %v895
        %v968 = vadd.f32 %v455, %v898
        %v969 = vadd.f32 %v456, %v903
        %v970 = vadd.f32 %v457, %v906
        %v971 = vadd.f32 %v458, %v911
        %v972 = vadd.f32 %v459, %v914
        %v973 = vadd.f32 %v460, %v919
        %v974 = vadd.f32 %v461, %v922
        %v975 = vadd.f32 %v462, %v927
        %v976 = vadd.f32 %v463, %v930
        %v977 = vadd.f32 %v464, %v935
        %v978 = vadd.f32 %v465, %v938
        %v979 = vadd.f32 %v466, %v943
        %v980 = vadd.f32 %v467, %v946
        %981 = vst [vmem:[#allocation2] sm:$0xff] %v949
        %982 = vst [vmem:[#allocation2 + $0x8] sm:$0xff] %v950
        %983 = vst [vmem:[#allocation2 + $0x10] sm:$0xff] %v951
        %984 = vst [vmem:[#allocation2 + $0x18] sm:$0xff] %v952
        %985 = vst [vmem:[#allocation2 + $0x20] sm:$0xff] %v953
        %986 = vst [vmem:[#allocation2 + $0x28] sm:$0xff] %v954
        %987 = vst [vmem:[#allocation2 + $0x30] sm:$0xff] %v955
        %988 = vst [vmem:[#allocation2 + $0x38] sm:$0xff] %v956
        %989 = vst [vmem:[#allocation2 + $0x40] sm:$0xff] %v957
        %990 = vst [vmem:[#allocation2 + $0x48] sm:$0xff] %v958
        %991 = vst [vmem:[#allocation2 + $0x50] sm:$0xff] %v959
        %992 = vst [vmem:[#allocation2 + $0x58] sm:$0xff] %v960
        %993 = vst [vmem:[#allocation2 + $0x60] sm:$0xff] %v961
        %994 = vst [vmem:[#allocation2 + $0x68] sm:$0xff] %v962
        %995 = vst [vmem:[#allocation2 + $0x70] sm:$0xff] %v963
        %996 = vst [vmem:[#allocation2 + $0x78] sm:$0xff] %v964
        %997 = vst [vmem:[#allocation2 + $0x80] sm:$0xff] %v965
        %998 = vst [vmem:[#allocation2 + $0x88] sm:$0xff] %v966
        %999 = vst [vmem:[#allocation2 + $0x90] sm:$0xff] %v967
        %1000 = vst [vmem:[#allocation2 + $0x98] sm:$0xff] %v968
        %1001 = vst [vmem:[#allocation2 + $0xa0] sm:$0xff] %v969
        %1002 = vst [vmem:[#allocation2 + $0xa8] sm:$0xff] %v970
        %1003 = vst [vmem:[#allocation2 + $0xb0] sm:$0xff] %v971
        %1004 = vst [vmem:[#allocation2 + $0xb8] sm:$0xff] %v972
        %1005 = vst [vmem:[#allocation2 + $0xc0] sm:$0xff] %v973
        %1006 = vst [vmem:[#allocation2 + $0xc8] sm:$0xff] %v974
        %1007 = vst [vmem:[#allocation2 + $0xd0] sm:$0xff] %v975
        %1008 = vst [vmem:[#allocation2 + $0xd8] sm:$0xff] %v976
        %1009 = vst [vmem:[#allocation2 + $0xe0] sm:$0xff] %v977
        %1010 = vst [vmem:[#allocation2 + $0xe8] sm:$0xff] %v978
        %1011 = vst [vmem:[#allocation2 + $0xf0] sm:$0xff] %v979
        %1012 = vst [vmem:[#allocation2 + $0xf8] sm:$0xff] %v980
        %p1013 = scmp.eq.s32.totalorder %s20, 1
        // Predicated region
        $region79: #{gnn_forward.2} parent=69 // pred_check
          %p1014 = pneg %p1013
        $region80: #{gnn_forward.2} parent=69 // pred_check_branch
          %1016 = sbr.rel (%p1014) target = $region82
        $region81: #{gnn_forward.2} parent=69 // pred_region
          %v1017 = vld [vmem:[#allocation2] sm:$0xff]
          %v1018 = vld [vmem:[#allocation2 + $0x8] sm:$0xff]
          %v1019 = vld [vmem:[#allocation2 + $0x10] sm:$0xff]
          %v1020 = vld [vmem:[#allocation2 + $0x18] sm:$0xff]
          %v1021 = vld [vmem:[#allocation2 + $0x20] sm:$0xff]
          %v1022 = vld [vmem:[#allocation2 + $0x28] sm:$0xff]
          %v1023 = vld [vmem:[#allocation2 + $0x30] sm:$0xff]
          %v1024 = vld [vmem:[#allocation2 + $0x38] sm:$0xff]
          %v1025 = vld [vmem:[#allocation2 + $0x40] sm:$0xff]
          %v1026 = vld [vmem:[#allocation2 + $0x48] sm:$0xff]
          %v1027 = vld [vmem:[#allocation2 + $0x50] sm:$0xff]
          %v1028 = vld [vmem:[#allocation2 + $0x58] sm:$0xff]
          %v1029 = vld [vmem:[#allocation2 + $0x60] sm:$0xff]
          %v1030 = vld [vmem:[#allocation2 + $0x68] sm:$0xff]
          %v1031 = vld [vmem:[#allocation2 + $0x70] sm:$0xff]
          %v1032 = vld [vmem:[#allocation2 + $0x78] sm:$0xff]
          %v1033 = vld [vmem:[#allocation2 + $0x80] sm:$0xff]
          %v1034 = vld [vmem:[#allocation2 + $0x88] sm:$0xff]
          %v1035 = vld [vmem:[#allocation2 + $0x90] sm:$0xff]
          %v1036 = vld [vmem:[#allocation2 + $0x98] sm:$0xff]
          %v1037 = vld [vmem:[#allocation2 + $0xa0] sm:$0xff]
          %v1038 = vld [vmem:[#allocation2 + $0xa8] sm:$0xff]
          %v1039 = vld [vmem:[#allocation2 + $0xb0] sm:$0xff]
          %v1040 = vld [vmem:[#allocation2 + $0xb8] sm:$0xff]
          %v1041 = vld [vmem:[#allocation2 + $0xc0] sm:$0xff]
          %v1042 = vld [vmem:[#allocation2 + $0xc8] sm:$0xff]
          %v1043 = vld [vmem:[#allocation2 + $0xd0] sm:$0xff]
          %v1044 = vld [vmem:[#allocation2 + $0xd8] sm:$0xff]
          %v1045 = vld [vmem:[#allocation2 + $0xe0] sm:$0xff]
          %v1046 = vld [vmem:[#allocation2 + $0xe8] sm:$0xff]
          %v1047 = vld [vmem:[#allocation2 + $0xf0] sm:$0xff]
          %v1048 = vld [vmem:[#allocation2 + $0xf8] sm:$0xff]
          %v1049 = vpack.c.bf16 %v1018, %v1017
          %v1050 = vpack.c.bf16 %v1020, %v1019
          %v1051 = vpack.c.bf16 %v1022, %v1021
          %v1052 = vpack.c.bf16 %v1024, %v1023
          %v1053 = vpack.c.bf16 %v1026, %v1025
          %v1054 = vpack.c.bf16 %v1028, %v1027
          %v1055 = vpack.c.bf16 %v1030, %v1029
          %v1056 = vpack.c.bf16 %v1032, %v1031
          %v1057 = vpack.c.bf16 %v1034, %v1033
          %v1058 = vpack.c.bf16 %v1036, %v1035
          %v1059 = vpack.c.bf16 %v1038, %v1037
          %v1060 = vpack.c.bf16 %v1040, %v1039
          %v1061 = vpack.c.bf16 %v1042, %v1041
          %v1062 = vpack.c.bf16 %v1044, %v1043
          %v1063 = vpack.c.bf16 %v1046, %v1045
          %v1064 = vpack.c.bf16 %v1048, %v1047
          %v1065 = vld [vmem:[%s2] sm:$0xf]
          %v1066 = vld [vmem:[%s2 + $0x4] sm:$0xf]
          %v1067 = vld [vmem:[%s2 + $0x8] sm:$0xf]
          %v1068 = vld [vmem:[%s2 + $0xc] sm:$0xf]
          %v1069 = vld [vmem:[%s2 + $0x10] sm:$0xf]
          %v1070 = vld [vmem:[%s2 + $0x14] sm:$0xf]
          %v1071 = vld [vmem:[%s2 + $0x18] sm:$0xf]
          %v1072 = vld [vmem:[%s2 + $0x1c] sm:$0xf]
          %v1073 = vld [vmem:[%s2 + $0x20] sm:$0xf]
          %v1074 = vld [vmem:[%s2 + $0x24] sm:$0xf]
          %v1075 = vld [vmem:[%s2 + $0x28] sm:$0xf]
          %v1076 = vld [vmem:[%s2 + $0x2c] sm:$0xf]
          %v1077 = vld [vmem:[%s2 + $0x30] sm:$0xf]
          %v1078 = vld [vmem:[%s2 + $0x34] sm:$0xf]
          %v1079 = vld [vmem:[%s2 + $0x38] sm:$0xf]
          %v1080 = vld [vmem:[%s2 + $0x3c] sm:$0xf]
          %v1081 = vld [vmem:[%s3] sm:$0x1]
          %v1083 = vlaneseq
          %v1084 = vshrl.u32 %v1083, 7
          %v1085 = vsub.s32 0, %v1084
          %v1086 = vrot.slane %v1081, %v1085
          %v1104 = vunpack.c.l.b16 %v1065
          %v1105 = vunpack.c.l.b16 %v1066
          %v1106 = vunpack.c.l.b16 %v1067
          %v1107 = vunpack.c.l.b16 %v1068
          %v1108 = vunpack.c.l.b16 %v1069
          %v1109 = vunpack.c.l.b16 %v1070
          %v1110 = vunpack.c.l.b16 %v1071
          %v1111 = vunpack.c.l.b16 %v1072
          %v1112 = vunpack.c.l.b16 %v1073
          %v1113 = vunpack.c.l.b16 %v1074
          %v1114 = vunpack.c.l.b16 %v1075
          %v1115 = vunpack.c.l.b16 %v1076
          %v1116 = vunpack.c.l.b16 %v1077
          %v1117 = vunpack.c.l.b16 %v1078
          %v1118 = vunpack.c.l.b16 %v1079
          %v1119 = vunpack.c.l.b16 %v1080
          %v1120 = vpack.c.b16 %v1105, %v1104
          %v1121 = vpack.c.b16 %v1107, %v1106
          %v1122 = vpack.c.b16 %v1109, %v1108
          %v1123 = vpack.c.b16 %v1111, %v1110
          %v1124 = vpack.c.b16 %v1113, %v1112
          %v1125 = vpack.c.b16 %v1115, %v1114
          %v1126 = vpack.c.b16 %v1117, %v1116
          %v1127 = vpack.c.b16 %v1119, %v1118
          %1136 = vmatprep.subr.bf16.mxu0 0
          %1137 = vmatpush1.bf16.msra.mxu0 %v1120
          %1138 = vmatprep.subr.bf16.mxu0 0
          %1139 = vmatpush1.bf16.msra.mxu0 %v1121
          %1140 = vmatprep.subr.bf16.mxu0 0
          %1141 = vmatpush1.bf16.msra.mxu0 %v1122
          %1142 = vmatprep.subr.bf16.mxu0 0
          %1143 = vmatpush1.bf16.msra.mxu0 %v1123
          %1144 = vmatprep.subr.bf16.mxu0 0
          %1145 = vmatpush1.bf16.msra.mxu0 %v1124
          %1146 = vmatprep.subr.bf16.mxu0 0
          %1147 = vmatpush1.bf16.msra.mxu0 %v1125
          %1148 = vmatprep.subr.bf16.mxu0 0
          %1149 = vmatpush1.bf16.msra.mxu0 %v1126
          %1150 = vmatprep.subr.bf16.mxu0 0
          %1151 = vmatpush1.bf16.msra.mxu0 %v1127
          %1152 = vmatprep.subr.bf16.mxu0 0
          %1153 = vmatpush1.bf16.msra.mxu0 0
          %1154 = vmatprep.subr.bf16.mxu0 0
          %1155 = vmatpush1.bf16.msra.mxu0 0
          %1156 = vmatprep.subr.bf16.mxu0 0
          %1157 = vmatpush1.bf16.msra.mxu0 0
          %1158 = vmatprep.subr.bf16.mxu0 0
          %1159 = vmatpush1.bf16.msra.mxu0 0
          %1160 = vmatprep.subr.bf16.mxu0 0
          %1161 = vmatpush1.bf16.msra.mxu0 0
          %1162 = vmatprep.subr.bf16.mxu0 0
          %1163 = vmatpush1.bf16.msra.mxu0 0
          %1164 = vmatprep.subr.bf16.mxu0 0
          %1165 = vmatpush1.bf16.msra.mxu0 0
          %1166 = vmatprep.subr.bf16.mxu0 0
          %1167 = vmatpush1.bf16.msra.mxu0 0
          %1168 = vmatprep.mubr.bf16.mxu0 0
          %1169 = vmatmul.mubr.bf16.gmra.mrb[0].mxu0 %v1049
          %v1170 = vpop.f32.mrb[0].mxu0
          %v1171 = vadd.f32 %v1086, %v1170
          %v1172 = vpop.f32.mrb[0].mxu0
          %v1173 = vpop.f32.mrb[0].mxu0
          %v1174 = vadd.f32 %v1086, %v1173
          %v1175 = vpop.f32.mrb[0].mxu0
          %1176 = vmatprep.mubr.bf16.mxu0 0
          %1177 = vmatmul.mubr.bf16.gmra.mrb[0].mxu0 %v1050
          %v1178 = vpop.f32.mrb[0].mxu0
          %v1179 = vadd.f32 %v1086, %v1178
          %v1180 = vpop.f32.mrb[0].mxu0
          %v1181 = vpop.f32.mrb[0].mxu0
          %v1182 = vadd.f32 %v1086, %v1181
          %v1183 = vpop.f32.mrb[0].mxu0
          %1184 = vmatprep.mubr.bf16.mxu0 0
          %1185 = vmatmul.mubr.bf16.gmra.mrb[0].mxu0 %v1051
          %v1186 = vpop.f32.mrb[0].mxu0
          %v1187 = vadd.f32 %v1086, %v1186
          %v1188 = vpop.f32.mrb[0].mxu0
          %v1189 = vpop.f32.mrb[0].mxu0
          %v1190 = vadd.f32 %v1086, %v1189
          %v1191 = vpop.f32.mrb[0].mxu0
          %1192 = vmatprep.mubr.bf16.mxu0 0
          %1193 = vmatmul.mubr.bf16.gmra.mrb[0].mxu0 %v1052
          %v1194 = vpop.f32.mrb[0].mxu0
          %v1195 = vadd.f32 %v1086, %v1194
          %v1196 = vpop.f32.mrb[0].mxu0
          %v1197 = vpop.f32.mrb[0].mxu0
          %v1198 = vadd.f32 %v1086, %v1197
          %v1199 = vpop.f32.mrb[0].mxu0
          %1200 = vmatprep.mubr.bf16.mxu0 0
          %1201 = vmatmul.mubr.bf16.gmra.mrb[0].mxu0 %v1053
          %v1202 = vpop.f32.mrb[0].mxu0
          %v1203 = vadd.f32 %v1086, %v1202
          %v1204 = vpop.f32.mrb[0].mxu0
          %v1205 = vpop.f32.mrb[0].mxu0
          %v1206 = vadd.f32 %v1086, %v1205
          %v1207 = vpop.f32.mrb[0].mxu0
          %1208 = vmatprep.mubr.bf16.mxu0 0
          %1209 = vmatmul.mubr.bf16.gmra.mrb[0].mxu0 %v1054
          %v1210 = vpop.f32.mrb[0].mxu0
          %v1211 = vadd.f32 %v1086, %v1210
          %v1212 = vpop.f32.mrb[0].mxu0
          %v1213 = vpop.f32.mrb[0].mxu0
          %v1214 = vadd.f32 %v1086, %v1213
          %v1215 = vpop.f32.mrb[0].mxu0
          %1216 = vmatprep.mubr.bf16.mxu0 0
          %1217 = vmatmul.mubr.bf16.gmra.mrb[0].mxu0 %v1055
          %v1218 = vpop.f32.mrb[0].mxu0
          %v1219 = vadd.f32 %v1086, %v1218
          %v1220 = vpop.f32.mrb[0].mxu0
          %v1221 = vpop.f32.mrb[0].mxu0
          %v1222 = vadd.f32 %v1086, %v1221
          %v1223 = vpop.f32.mrb[0].mxu0
          %1224 = vmatprep.mubr.bf16.mxu0 0
          %1225 = vmatmul.mubr.bf16.gmra.mrb[0].mxu0 %v1056
          %v1226 = vpop.f32.mrb[0].mxu0
          %v1227 = vadd.f32 %v1086, %v1226
          %v1228 = vpop.f32.mrb[0].mxu0
          %v1229 = vpop.f32.mrb[0].mxu0
          %v1230 = vadd.f32 %v1086, %v1229
          %v1231 = vpop.f32.mrb[0].mxu0
          %1232 = vmatprep.mubr.bf16.mxu0 0
          %1233 = vmatmul.mubr.bf16.gmra.mrb[0].mxu0 %v1057
          %v1234 = vpop.f32.mrb[0].mxu0
          %v1235 = vadd.f32 %v1086, %v1234
          %v1236 = vpop.f32.mrb[0].mxu0
          %v1237 = vpop.f32.mrb[0].mxu0
          %v1238 = vadd.f32 %v1086, %v1237
          %v1239 = vpop.f32.mrb[0].mxu0
          %1240 = vmatprep.mubr.bf16.mxu0 0
          %1241 = vmatmul.mubr.bf16.gmra.mrb[0].mxu0 %v1058
          %v1242 = vpop.f32.mrb[0].mxu0
          %v1243 = vadd.f32 %v1086, %v1242
          %v1244 = vpop.f32.mrb[0].mxu0
          %v1245 = vpop.f32.mrb[0].mxu0
          %v1246 = vadd.f32 %v1086, %v1245
          %v1247 = vpop.f32.mrb[0].mxu0
          %1248 = vmatprep.mubr.bf16.mxu0 0
          %1249 = vmatmul.mubr.bf16.gmra.mrb[0].mxu0 %v1059
          %v1250 = vpop.f32.mrb[0].mxu0
          %v1251 = vadd.f32 %v1086, %v1250
          %v1252 = vpop.f32.mrb[0].mxu0
          %v1253 = vpop.f32.mrb[0].mxu0
          %v1254 = vadd.f32 %v1086, %v1253
          %v1255 = vpop.f32.mrb[0].mxu0
          %1256 = vmatprep.mubr.bf16.mxu0 0
          %1257 = vmatmul.mubr.bf16.gmra.mrb[0].mxu0 %v1060
          %v1258 = vpop.f32.mrb[0].mxu0
          %v1259 = vadd.f32 %v1086, %v1258
          %v1260 = vpop.f32.mrb[0].mxu0
          %v1261 = vpop.f32.mrb[0].mxu0
          %v1262 = vadd.f32 %v1086, %v1261
          %v1263 = vpop.f32.mrb[0].mxu0
          %1264 = vmatprep.mubr.bf16.mxu0 0
          %1265 = vmatmul.mubr.bf16.gmra.mrb[0].mxu0 %v1061
          %v1266 = vpop.f32.mrb[0].mxu0
          %v1267 = vadd.f32 %v1086, %v1266
          %v1268 = vpop.f32.mrb[0].mxu0
          %v1269 = vpop.f32.mrb[0].mxu0
          %v1270 = vadd.f32 %v1086, %v1269
          %v1271 = vpop.f32.mrb[0].mxu0
          %1272 = vmatprep.mubr.bf16.mxu0 0
          %1273 = vmatmul.mubr.bf16.gmra.mrb[0].mxu0 %v1062
          %v1274 = vpop.f32.mrb[0].mxu0
          %v1275 = vadd.f32 %v1086, %v1274
          %v1276 = vpop.f32.mrb[0].mxu0
          %v1277 = vpop.f32.mrb[0].mxu0
          %v1278 = vadd.f32 %v1086, %v1277
          %v1279 = vpop.f32.mrb[0].mxu0
          %1280 = vmatprep.mubr.bf16.mxu0 0
          %1281 = vmatmul.mubr.bf16.gmra.mrb[0].mxu0 %v1063
          %v1282 = vpop.f32.mrb[0].mxu0
          %v1283 = vadd.f32 %v1086, %v1282
          %v1284 = vpop.f32.mrb[0].mxu0
          %v1285 = vpop.f32.mrb[0].mxu0
          %v1286 = vadd.f32 %v1086, %v1285
          %v1287 = vpop.f32.mrb[0].mxu0
          %1288 = vmatprep.mubr.bf16.mxu0 0
          %1289 = vmatmul.mubr.bf16.gmra.mrb[0].mxu0 %v1064
          %v1290 = vpop.f32.mrb[0].mxu0
          %v1291 = vadd.f32 %v1086, %v1290
          %v1292 = vpop.f32.mrb[0].mxu0
          %v1293 = vpop.f32.mrb[0].mxu0
          %v1294 = vadd.f32 %v1086, %v1293
          %v1295 = vpop.f32.mrb[0].mxu0
          %1296 = vdwg.mxu0
          %v1297 = vmax.f32 %v1171, 0.0
          %v1298 = vmax.f32 %v1174, 0.0
          %v1299 = vmax.f32 %v1179, 0.0
          %v1300 = vmax.f32 %v1182, 0.0
          %v1301 = vmax.f32 %v1187, 0.0
          %v1302 = vmax.f32 %v1190, 0.0
          %v1303 = vmax.f32 %v1195, 0.0
          %v1304 = vmax.f32 %v1198, 0.0
          %v1305 = vmax.f32 %v1203, 0.0
          %v1306 = vmax.f32 %v1206, 0.0
          %v1307 = vmax.f32 %v1211, 0.0
          %v1308 = vmax.f32 %v1214, 0.0
          %v1309 = vmax.f32 %v1219, 0.0
          %v1310 = vmax.f32 %v1222, 0.0
          %v1311 = vmax.f32 %v1227, 0.0
          %v1312 = vmax.f32 %v1230, 0.0
          %v1313 = vmax.f32 %v1235, 0.0
          %v1314 = vmax.f32 %v1238, 0.0
          %v1315 = vmax.f32 %v1243, 0.0
          %v1316 = vmax.f32 %v1246, 0.0
          %v1317 = vmax.f32 %v1251, 0.0
          %v1318 = vmax.f32 %v1254, 0.0
          %v1319 = vmax.f32 %v1259, 0.0
          %v1320 = vmax.f32 %v1262, 0.0
          %v1321 = vmax.f32 %v1267, 0.0
          %v1322 = vmax.f32 %v1270, 0.0
          %v1323 = vmax.f32 %v1275, 0.0
          %v1324 = vmax.f32 %v1278, 0.0
          %v1325 = vmax.f32 %v1283, 0.0
          %v1326 = vmax.f32 %v1286, 0.0
          %v1327 = vmax.f32 %v1291, 0.0
          %v1328 = vmax.f32 %v1294, 0.0
          %v1329 = vpack.c.bf16 %v1298, %v1297
          %v1330 = vpack.c.bf16 %v1300, %v1299
          %v1331 = vpack.c.bf16 %v1302, %v1301
          %v1332 = vpack.c.bf16 %v1304, %v1303
          %v1333 = vpack.c.bf16 %v1306, %v1305
          %v1334 = vpack.c.bf16 %v1308, %v1307
          %v1335 = vpack.c.bf16 %v1310, %v1309
          %v1336 = vpack.c.bf16 %v1312, %v1311
          %v1337 = vpack.c.bf16 %v1314, %v1313
          %v1338 = vpack.c.bf16 %v1316, %v1315
          %v1339 = vpack.c.bf16 %v1318, %v1317
          %v1340 = vpack.c.bf16 %v1320, %v1319
          %v1341 = vpack.c.bf16 %v1322, %v1321
          %v1342 = vpack.c.bf16 %v1324, %v1323
          %v1343 = vpack.c.bf16 %v1326, %v1325
          %v1344 = vpack.c.bf16 %v1328, %v1327
          %v1361 = vunpack.c.l.b16 %v1329
          %v1362 = vunpack.c.h.b16 %v1329
          %v1363 = vunpack.c.l.b16 %v1330
          %v1364 = vunpack.c.h.b16 %v1330
          %v1365 = vunpack.c.l.b16 %v1331
          %v1366 = vunpack.c.h.b16 %v1331
          %v1367 = vunpack.c.l.b16 %v1332
          %v1368 = vunpack.c.h.b16 %v1332
          %v1369 = vunpack.c.l.b16 %v1333
          %v1370 = vunpack.c.h.b16 %v1333
          %v1371 = vunpack.c.l.b16 %v1334
          %v1372 = vunpack.c.h.b16 %v1334
          %v1373 = vunpack.c.l.b16 %v1335
          %v1374 = vunpack.c.h.b16 %v1335
          %v1375 = vunpack.c.l.b16 %v1336
          %v1376 = vunpack.c.h.b16 %v1336
          %v1377 = vunpack.c.l.b16 %v1337
          %v1378 = vunpack.c.h.b16 %v1337
          %v1379 = vunpack.c.l.b16 %v1338
          %v1380 = vunpack.c.h.b16 %v1338
          %v1381 = vunpack.c.l.b16 %v1339
          %v1382 = vunpack.c.h.b16 %v1339
          %v1383 = vunpack.c.l.b16 %v1340
          %v1384 = vunpack.c.h.b16 %v1340
          %v1385 = vunpack.c.l.b16 %v1341
          %v1386 = vunpack.c.h.b16 %v1341
          %v1387 = vunpack.c.l.b16 %v1342
          %v1388 = vunpack.c.h.b16 %v1342
          %v1389 = vunpack.c.l.b16 %v1343
          %v1390 = vunpack.c.h.b16 %v1343
          %v1391 = vunpack.c.l.b16 %v1344
          %v1392 = vunpack.c.h.b16 %v1344
          %v1393 = vpack.c.b16 %v1361, %v1361
          %v1394 = vpack.c.b16 %v1362, %v1362
          %v1395 = vpack.c.b16 %v1363, %v1363
          %v1396 = vpack.c.b16 %v1364, %v1364
          %v1397 = vpack.c.b16 %v1365, %v1365
          %v1398 = vpack.c.b16 %v1366, %v1366
          %v1399 = vpack.c.b16 %v1367, %v1367
          %v1400 = vpack.c.b16 %v1368, %v1368
          %v1401 = vpack.c.b16 %v1369, %v1369
          %v1402 = vpack.c.b16 %v1370, %v1370
          %v1403 = vpack.c.b16 %v1371, %v1371
          %v1404 = vpack.c.b16 %v1372, %v1372
          %v1405 = vpack.c.b16 %v1373, %v1373
          %v1406 = vpack.c.b16 %v1374, %v1374
          %v1407 = vpack.c.b16 %v1375, %v1375
          %v1408 = vpack.c.b16 %v1376, %v1376
          %v1409 = vpack.c.b16 %v1377, %v1377
          %v1410 = vpack.c.b16 %v1378, %v1378
          %v1411 = vpack.c.b16 %v1379, %v1379
          %v1412 = vpack.c.b16 %v1380, %v1380
          %v1413 = vpack.c.b16 %v1381, %v1381
          %v1414 = vpack.c.b16 %v1382, %v1382
          %v1415 = vpack.c.b16 %v1383, %v1383
          %v1416 = vpack.c.b16 %v1384, %v1384
          %v1417 = vpack.c.b16 %v1385, %v1385
          %v1418 = vpack.c.b16 %v1386, %v1386
          %v1419 = vpack.c.b16 %v1387, %v1387
          %v1420 = vpack.c.b16 %v1388, %v1388
          %v1421 = vpack.c.b16 %v1389, %v1389
          %v1422 = vpack.c.b16 %v1390, %v1390
          %v1423 = vpack.c.b16 %v1391, %v1391
          %v1424 = vpack.c.b16 %v1392, %v1392
          %1457 = vst [vmem:[%s397] sm:$0xf] %v1393
          %1458 = vst [vmem:[%s397 + $0x4] sm:$0xf] %v1394
          %1459 = vst [vmem:[%s397 + $0x8] sm:$0xf] %v1395
          %1460 = vst [vmem:[%s397 + $0xc] sm:$0xf] %v1396
          %1461 = vst [vmem:[%s397 + $0x10] sm:$0xf] %v1397
          %1462 = vst [vmem:[%s397 + $0x14] sm:$0xf] %v1398
          %1463 = vst [vmem:[%s397 + $0x18] sm:$0xf] %v1399
          %1464 = vst [vmem:[%s397 + $0x1c] sm:$0xf] %v1400
          %1465 = vst [vmem:[%s397 + $0x20] sm:$0xf] %v1401
          %1466 = vst [vmem:[%s397 + $0x24] sm:$0xf] %v1402
          %1467 = vst [vmem:[%s397 + $0x28] sm:$0xf] %v1403
          %1468 = vst [vmem:[%s397 + $0x2c] sm:$0xf] %v1404
          %1469 = vst [vmem:[%s397 + $0x30] sm:$0xf] %v1405
          %1470 = vst [vmem:[%s397 + $0x34] sm:$0xf] %v1406
          %1471 = vst [vmem:[%s397 + $0x38] sm:$0xf] %v1407
          %1472 = vst [vmem:[%s397 + $0x3c] sm:$0xf] %v1408
          %1473 = vst [vmem:[%s397 + $0x40] sm:$0xf] %v1409
          %1474 = vst [vmem:[%s397 + $0x44] sm:$0xf] %v1410
          %1475 = vst [vmem:[%s397 + $0x48] sm:$0xf] %v1411
          %1476 = vst [vmem:[%s397 + $0x4c] sm:$0xf] %v1412
          %1477 = vst [vmem:[%s397 + $0x50] sm:$0xf] %v1413
          %1478 = vst [vmem:[%s397 + $0x54] sm:$0xf] %v1414
          %1479 = vst [vmem:[%s397 + $0x58] sm:$0xf] %v1415
          %1480 = vst [vmem:[%s397 + $0x5c] sm:$0xf] %v1416
          %1481 = vst [vmem:[%s397 + $0x60] sm:$0xf] %v1417
          %1482 = vst [vmem:[%s397 + $0x64] sm:$0xf] %v1418
          %1483 = vst [vmem:[%s397 + $0x68] sm:$0xf] %v1419
          %1484 = vst [vmem:[%s397 + $0x6c] sm:$0xf] %v1420
          %1485 = vst [vmem:[%s397 + $0x70] sm:$0xf] %v1421
          %1486 = vst [vmem:[%s397 + $0x74] sm:$0xf] %v1422
          %1487 = vst [vmem:[%s397 + $0x78] sm:$0xf] %v1423
          %1488 = vst [vmem:[%s397 + $0x7c] sm:$0xf] %v1424
        $region82: #{gnn_forward.2} parent=69 // pred_fallthru
          _
        %s1489 = smul.u32 32, %s19
        %p1490 = scmp.lt.s32.totalorder %s1489, 63
        %s1491 = scalar_select %p1490, %s1489, 63
        %s1492 = smul.addr %s1491, 4
        %s1493 = scalar_lea.vmem %s4, %s1492
        // Predicated region
        $region83: #{gnn_forward.2} parent=69 // pred_check
          %p1494 = pneg %p141
        $region84: #{gnn_forward.2} parent=69 // pred_check_branch
          %1496 = sbr.rel (%p1494) target = $region86
        $region85: #{gnn_forward.2} parent=69 // pred_region
          %s1497 = smul.u32 32, %s19
        $region86: #{gnn_forward.2} parent=69 // pred_fallthru
          _
      $region70: #{gnn_forward.2} parent=5 // pred_fallthru
        _
      %p1498 = scmp.le.s32.totalorder 2, %s10
      // Predicated region
      $region87: #{gnn_forward.2} parent=5 // pred_check
        %p1499 = pneg %p1498
      $region88: #{gnn_forward.2} parent=5 // pred_check_branch
        %1501 = sbr.rel (%p1499) target = $region90
      $region89: #{gnn_forward.2} parent=5 // pred_region
        %s1502 = ssub.s32 %s10, 2
        // Predicated region
        $region91: #{gnn_forward.2} parent=89 // pred_check
          %p1503 = pneg %p147
        $region92: #{gnn_forward.2} parent=89 // pred_check_branch
          %1505 = sbr.rel (%p1503) target = $region94
        $region93: #{gnn_forward.2} parent=89 // pred_region
          %s1506 = smul.u32 32, %s21
          %p1507 = scmp.lt.s32.totalorder %s1506, 63
          %s1508 = scalar_select %p1507, %s1506, 63
          %s1509 = smul.addr %s1508, 4
          %s1510 = scalar_lea.vmem %s4, %s1509
        $region94: #{gnn_forward.2} parent=89 // pred_fallthru
          _
      $region90: #{gnn_forward.2} parent=5 // pred_fallthru
        _
    $region6: #{gnn_forward.2} parent=1 // loop_footer
      %s14 = sadd.s32 1, %s10
    $region7: #{gnn_forward.2} parent=1 // loop_footer_branch
      %9 = sbr.rel target = $region3
    $region8: #{gnn_forward.2} parent=1 // loop_exit
      _

</llo_original>
